<compile_context>
chip_gen: v7x
topology: tpu7x:2x2x1
jax: 0.10.0
libtpu: 0.0.40
codegen_flags: <defaults>
</compile_context>

<pallas_src>
import numpy as np
import jax
import jax.numpy as jnp
from jax.experimental import pallas as pl
from jax.experimental.pallas import tpu as pltpu


# ----------------------------------------------------------------------------
# Geometry helpers
# ----------------------------------------------------------------------------
def _pair(v):
    return (v, v) if isinstance(v, int) else tuple(v)


def _round_up(x, m):
    return ((x + m - 1) // m) * m


def _fold_geometry(output_size, kernel_size, dilation, padding, stride):
    H, W = _pair(output_size)
    kh, kw = _pair(kernel_size)
    dh, dw = _pair(dilation)
    ph, pw = _pair(padding)
    sh, sw = _pair(stride)
    Lh = (H + 2 * ph - dh * (kh - 1) - 1) // sh + 1
    Lw = (W + 2 * pw - dw * (kw - 1) - 1) // sw + 1
    return (H, W), (kh, kw), (dh, dw), (ph, pw), (sh, sw), (Lh, Lw)


# ----------------------------------------------------------------------------
# Kernel: one grid step == one fold configuration
# ----------------------------------------------------------------------------
def _make_fold_kernel(khm, ncm, lhm, hp, wp):
    """Block shapes seen by the kernel:
      x_ref : (1, khm, ncm*lhm, kwm*lwm)  packed input, rows (n, lh), cols (j, lw)
      a_ref : (1, hp, khm*lhm)            row-scatter A^T, cols (i, lh)
      b_ref : (1, kwm*lwm, wp)            col-scatter B, rows (j, lw)
      o_ref : (1, ncm, hp, wp)            output canvas (lane-dense, padded)
      z_ref : (ncm, khm*lhm, wp)          VMEM scratch for the width-scattered maps
    """

    def kernel(x_ref, a_ref, b_ref, o_ref, z_ref):
        b = b_ref[0]                                        # (kw*Lw, Wp)
        # Stage 1: width scatter, batched over all channels for each kernel row.
        for i in range(khm):
            y = jnp.dot(x_ref[0, i], b,
                        preferred_element_type=jnp.float32)  # (ncm*lhm, wp)
            for n in range(ncm):
                z_ref[n, i * lhm:(i + 1) * lhm, :] = y[n * lhm:(n + 1) * lhm, :]
        # Stage 2: height scatter, one matmul per channel over the (i, lh) axis.
        a = a_ref[0]                                        # (hp, khm*lhm)
        for n in range(ncm):
            o_ref[0, n] = jnp.dot(a, z_ref[n],
                                  preferred_element_type=jnp.float32)

    return kernel


# ----------------------------------------------------------------------------
# Wrapper: fuse all folds into one pallas_call
# ----------------------------------------------------------------------------
def fold_multi_pallas(xs, configs):
    F = len(xs)
    geoms = [
        _fold_geometry(cfg["output_size"], cfg["kernel_size"],
                       cfg.get("dilation", 1), cfg.get("padding", 0),
                       cfg.get("stride", 1))
        for cfg in configs
    ]

    # Common padded dimensions across all folds.
    khm = max(g[1][0] for g in geoms)
    kwm = max(g[1][1] for g in geoms)
    Lhm = _round_up(max(g[5][0] for g in geoms), 8)
    Lwm = max(g[5][1] for g in geoms)
    Hp = _round_up(max(g[0][0] for g in geoms), 8)
    Wp = _round_up(max(g[0][1] for g in geoms), 128)    # lane-dense output
    NCm = max(x.shape[0] * (x.shape[1] // (g[1][0] * g[1][1]))
              for x, g in zip(xs, geoms))
    KLh = khm * Lhm
    JLw = kwm * Lwm

    x_blocks, a_blocks, b_blocks, metas = [], [], [], []
    for x, g in zip(xs, geoms):
        (H, W), (kh, kw), (dh, dw), (ph, pw), (sh, sw), (Lh, Lw) = g
        K = kh * kw
        N, CK, L = x.shape
        assert CK % K == 0, "channel dim must be divisible by kh*kw"
        assert L == Lh * Lw, f"expected L={Lh * Lw}, got {L}"
        C = CK // K
        NC = N * C
        metas.append((N, C, H, W))

        # Tiny 0/1 scatter tables (host / trace time).
        A = np.zeros((Hp, KLh), np.float32)                 # A^T: (oh, (i, lh))
        for i in range(kh):
            for lh in range(Lh):
                oh = lh * sh - ph + i * dh
                if 0 <= oh < H:
                    A[oh, i * Lhm + lh] = 1.0
        B = np.zeros((JLw, Wp), np.float32)                 # B: ((j, lw), ow)
        for j in range(kw):
            for lw in range(Lw):
                ow = lw * sw - pw + j * dw
                if 0 <= ow < W:
                    B[j * Lwm + lw, ow] = 1.0
        a_blocks.append(A)
        b_blocks.append(B)

        # Pack input: (N, C*K, L) -> (kh, N*C*Lh, kw*Lw), zero-padded.
        xr = x.astype(jnp.float32).reshape(N, C, kh, kw, Lh, Lw)
        xr = jnp.transpose(xr, (2, 0, 1, 4, 3, 5))          # (kh, N, C, Lh, kw, Lw)
        xr = jnp.pad(xr, ((0, khm - kh), (0, 0), (0, 0),
                          (0, Lhm - Lh), (0, kwm - kw), (0, Lwm - Lw)))
        xr = xr.reshape(khm, NC * Lhm, JLw)
        xr = jnp.pad(xr, ((0, 0), (0, (NCm - NC) * Lhm), (0, 0)))
        x_blocks.append(xr)

    x_all = jnp.stack(x_blocks, axis=0)                     # (F, khm, NCm*Lhm, JLw)
    a_all = jnp.asarray(np.stack(a_blocks, axis=0))         # (F, Hp, KLh)
    b_all = jnp.asarray(np.stack(b_blocks, axis=0))         # (F, JLw, Wp)

    kernel = _make_fold_kernel(khm, NCm, Lhm, Hp, Wp)
    out = pl.pallas_call(
        kernel,
        out_shape=jax.ShapeDtypeStruct((F, NCm, Hp, Wp), jnp.float32),
        grid=(F,),
        in_specs=[
            pl.BlockSpec((1, khm, NCm * Lhm, JLw), lambda f: (f, 0, 0, 0)),
            pl.BlockSpec((1, Hp, KLh), lambda f: (f, 0, 0)),
            pl.BlockSpec((1, JLw, Wp), lambda f: (f, 0, 0)),
        ],
        out_specs=pl.BlockSpec((1, NCm, Hp, Wp), lambda f: (f, 0, 0, 0)),
        scratch_shapes=[pltpu.VMEM((NCm, KLh, Wp), jnp.float32)],
        compiler_params=pltpu.CompilerParams(
            dimension_semantics=("parallel",),
            vmem_limit_bytes=32 * 1024 * 1024,
        ),
    )(x_all, a_all, b_all)

    results = []
    for f, (N, C, H, W) in enumerate(metas):
        results.append(out[f, :N * C, :H, :W].reshape(N, C, H, W))
    return results


_CONFIGS = (
    dict(output_size=22, kernel_size=3, dilation=1, padding=0, stride=1),
    dict(output_size=(17, 18), kernel_size=(2, 4), stride=(2, 1), padding=2,
         dilation=1),
    dict(output_size=(5, 11), kernel_size=(2, 3), stride=1, padding=(2, 4),
         dilation=(1, 2)),
)


@jax.jit
def model_forward(x, y, z):
    xo, yo, zo = fold_multi_pallas([x, y, z], list(_CONFIGS))
    return xo, yo, zo


# ----------------------------------------------------------------------------
# Pure-numpy reference (direct scatter-add) for verification
# ----------------------------------------------------------------------------
def fold_ref_numpy(x, output_size, kernel_size, dilation=1, padding=0, stride=1):
    (H, W), (kh, kw), (dh, dw), (ph, pw), (sh, sw), (Lh, Lw) = _fold_geometry(
        output_size, kernel_size, dilation, padding, stride)
    x = np.asarray(x, dtype=np.float32)
    N, CK, L = x.shape
    K = kh * kw
    C = CK // K
    xr = x.reshape(N, C, kh, kw, Lh, Lw)
    out = np.zeros((N, C, H, W), dtype=np.float32)
    for i in range(kh):
        for j in range(kw):
            for lh in range(Lh):
                oh = lh * sh - ph + i * dh
                if not (0 <= oh < H):
                    continue
                for lw in range(Lw):
                    ow = lw * sw - pw + j * dw
                    if not (0 <= ow < W):
                        continue
                    out[:, :, oh, ow] += xr[:, :, i, j, lh, lw]
    return out


if __name__ == "__main__":
    key = jax.random.PRNGKey(0)
    kx, ky, kz = jax.random.split(key, 3)

    N, C = 2, 2
    # fold_0: kernel 3x3, out 22x22 -> L = 20*20 = 400
    x = jax.random.normal(kx, (N, C * 3 * 3, 400), dtype=jnp.float32)
    # fold_1: kernel (2,4), out (17,18), stride (2,1), pad 2 -> L = 10*19 = 190
    y = jax.random.normal(ky, (N, C * 2 * 4, 190), dtype=jnp.float32)
    # fold_2: kernel (2,3), out (5,11), pad (2,4), dil (1,2) -> L = 8*15 = 120
    z = jax.random.normal(kz, (N, C * 2 * 3, 120), dtype=jnp.float32)

    xo, yo, zo = model_forward(x, y, z)
    jax.block_until_ready((xo, yo, zo))

    # Verify against a direct scatter-add reference.
    xr = fold_ref_numpy(x, 22, 3)
    yr = fold_ref_numpy(y, (17, 18), (2, 4), stride=(2, 1), padding=2, dilation=1)
    zr = fold_ref_numpy(z, (5, 11), (2, 3), stride=1, padding=(2, 4), dilation=(1, 2))

    assert xo.shape == (N, C, 22, 22)
    assert yo.shape == (N, C, 17, 18)
    assert zo.shape == (N, C, 5, 11)
    np.testing.assert_allclose(np.asarray(xo), xr, rtol=1e-5, atol=1e-5)
    np.testing.assert_allclose(np.asarray(yo), yr, rtol=1e-5, atol=1e-5)
    np.testing.assert_allclose(np.asarray(zo), zr, rtol=1e-5, atol=1e-5)

    print("KERNEL_OK")
</pallas_src>

<mosaic_0001>
module attributes {stable_mosaic.version = 11 : i64} {
  func.func @kernel(%arg0: i32, %arg1: memref<1x3x96x80xf32, #tpu.memory_space<vmem>>, %arg2: memref<1x24x72xf32, #tpu.memory_space<vmem>>, %arg3: memref<1x80x128xf32, #tpu.memory_space<vmem>>, %arg4: memref<1x4x24x128xf32, #tpu.memory_space<vmem>>, %arg5: memref<4x72x128xf32, #tpu.memory_space<vmem>>) attributes {dimension_semantics = [#tpu.dimension_semantics<parallel>], iteration_bounds = array<i64: 3>, scalar_prefetch = 0 : i64, scratch_operands = 1 : i64, tpu.core_type = #tpu.core_type<tc>, window_params = [{transform_indices = @transform_0, window_bounds = array<i64: 1, 3, 96, 80>}, {transform_indices = @transform_1, window_bounds = array<i64: 1, 24, 72>}, {transform_indices = @transform_2, window_bounds = array<i64: 1, 80, 128>}, {transform_indices = @transform_3, window_bounds = array<i64: 1, 4, 24, 128>}]} {
    %c0 = arith.constant 0 : index
    %c0_0 = arith.constant 0 : index
    %c0_1 = arith.constant 0 : index
    %0 = vector.load %arg3[%c0, %c0_0, %c0_1] : memref<1x80x128xf32, #tpu.memory_space<vmem>>, vector<1x80x128xf32>
    %1 = vector.shape_cast %0 : vector<1x80x128xf32> to vector<80x128xf32>
    %c0_2 = arith.constant 0 : index
    %c0_3 = arith.constant 0 : index
    %c0_4 = arith.constant 0 : index
    %c0_5 = arith.constant 0 : index
    %2 = vector.load %arg1[%c0_2, %c0_3, %c0_4, %c0_5] : memref<1x3x96x80xf32, #tpu.memory_space<vmem>>, vector<1x1x96x80xf32>
    %3 = vector.shape_cast %2 : vector<1x1x96x80xf32> to vector<96x80xf32>
    %cst = arith.constant dense<0.000000e+00> : vector<96x128xf32>
    %4 = tpu.matmul %3, %1, %cst {dimension_numbers = #tpu.dot_dimension_numbers<[1], [0], [0], [1], [0, 0, 1, 1], [], []>} : vector<96x80xf32>, vector<80x128xf32>, vector<96x128xf32> -> vector<96x128xf32>
    %5 = vector.extract_strided_slice %4 {offsets = [0, 0], sizes = [24, 128], strides = [1, 1]} : vector<96x128xf32> to vector<24x128xf32>
    %c0_6 = arith.constant 0 : index
    %c0_7 = arith.constant 0 : index
    %c0_8 = arith.constant 0 : index
    %6 = vector.load %arg5[%c0_6, %c0_7, %c0_8] : memref<4x72x128xf32, #tpu.memory_space<vmem>>, vector<1x24x128xf32>
    %7 = vector.shape_cast %6 : vector<1x24x128xf32> to vector<24x128xf32>
    %8 = vector.shape_cast %5 : vector<24x128xf32> to vector<1x24x128xf32>
    tpu.vector_store %arg5[%c0_6, %c0_7, %c0_8], %8 {strides = array<i32>} : memref<4x72x128xf32, #tpu.memory_space<vmem>>, vector<1x24x128xf32>,
    %9 = vector.extract_strided_slice %4 {offsets = [24, 0], sizes = [24, 128], strides = [1, 1]} : vector<96x128xf32> to vector<24x128xf32>
    %c1 = arith.constant 1 : index
    %c0_9 = arith.constant 0 : index
    %c0_10 = arith.constant 0 : index
    %10 = vector.load %arg5[%c1, %c0_9, %c0_10] : memref<4x72x128xf32, #tpu.memory_space<vmem>>, vector<1x24x128xf32>
    %11 = vector.shape_cast %10 : vector<1x24x128xf32> to vector<24x128xf32>
    %12 = vector.shape_cast %9 : vector<24x128xf32> to vector<1x24x128xf32>
    tpu.vector_store %arg5[%c1, %c0_9, %c0_10], %12 {strides = array<i32>} : memref<4x72x128xf32, #tpu.memory_space<vmem>>, vector<1x24x128xf32>,
    %13 = vector.extract_strided_slice %4 {offsets = [48, 0], sizes = [24, 128], strides = [1, 1]} : vector<96x128xf32> to vector<24x128xf32>
    %c2 = arith.constant 2 : index
    %c0_11 = arith.constant 0 : index
    %c0_12 = arith.constant 0 : index
    %14 = vector.load %arg5[%c2, %c0_11, %c0_12] : memref<4x72x128xf32, #tpu.memory_space<vmem>>, vector<1x24x128xf32>
    %15 = vector.shape_cast %14 : vector<1x24x128xf32> to vector<24x128xf32>
    %16 = vector.shape_cast %13 : vector<24x128xf32> to vector<1x24x128xf32>
    tpu.vector_store %arg5[%c2, %c0_11, %c0_12], %16 {strides = array<i32>} : memref<4x72x128xf32, #tpu.memory_space<vmem>>, vector<1x24x128xf32>,
    %17 = vector.extract_strided_slice %4 {offsets = [72, 0], sizes = [24, 128], strides = [1, 1]} : vector<96x128xf32> to vector<24x128xf32>
    %c3 = arith.constant 3 : index
    %c0_13 = arith.constant 0 : index
    %c0_14 = arith.constant 0 : index
    %18 = vector.load %arg5[%c3, %c0_13, %c0_14] : memref<4x72x128xf32, #tpu.memory_space<vmem>>, vector<1x24x128xf32>
    %19 = vector.shape_cast %18 : vector<1x24x128xf32> to vector<24x128xf32>
    %20 = vector.shape_cast %17 : vector<24x128xf32> to vector<1x24x128xf32>
    tpu.vector_store %arg5[%c3, %c0_13, %c0_14], %20 {strides = array<i32>} : memref<4x72x128xf32, #tpu.memory_space<vmem>>, vector<1x24x128xf32>,
    %c0_15 = arith.constant 0 : index
    %c1_16 = arith.constant 1 : index
    %c0_17 = arith.constant 0 : index
    %c0_18 = arith.constant 0 : index
    %21 = vector.load %arg1[%c0_15, %c1_16, %c0_17, %c0_18] : memref<1x3x96x80xf32, #tpu.memory_space<vmem>>, vector<1x1x96x80xf32>
    %22 = vector.shape_cast %21 : vector<1x1x96x80xf32> to vector<96x80xf32>
    %cst_19 = arith.constant dense<0.000000e+00> : vector<96x128xf32>
    %23 = tpu.matmul %22, %1, %cst_19 {dimension_numbers = #tpu.dot_dimension_numbers<[1], [0], [0], [1], [0, 0, 1, 1], [], []>} : vector<96x80xf32>, vector<80x128xf32>, vector<96x128xf32> -> vector<96x128xf32>
    %24 = vector.extract_strided_slice %23 {offsets = [0, 0], sizes = [24, 128], strides = [1, 1]} : vector<96x128xf32> to vector<24x128xf32>
    %c0_20 = arith.constant 0 : index
    %c24 = arith.constant 24 : index
    %c0_21 = arith.constant 0 : index
    %25 = vector.load %arg5[%c0_20, %c24, %c0_21] : memref<4x72x128xf32, #tpu.memory_space<vmem>>, vector<1x24x128xf32>
    %26 = vector.shape_cast %25 : vector<1x24x128xf32> to vector<24x128xf32>
    %27 = vector.shape_cast %24 : vector<24x128xf32> to vector<1x24x128xf32>
    tpu.vector_store %arg5[%c0_20, %c24, %c0_21], %27 {strides = array<i32>} : memref<4x72x128xf32, #tpu.memory_space<vmem>>, vector<1x24x128xf32>,
    %28 = vector.extract_strided_slice %23 {offsets = [24, 0], sizes = [24, 128], strides = [1, 1]} : vector<96x128xf32> to vector<24x128xf32>
    %c1_22 = arith.constant 1 : index
    %c24_23 = arith.constant 24 : index
    %c0_24 = arith.constant 0 : index
    %29 = vector.load %arg5[%c1_22, %c24_23, %c0_24] : memref<4x72x128xf32, #tpu.memory_space<vmem>>, vector<1x24x128xf32>
    %30 = vector.shape_cast %29 : vector<1x24x128xf32> to vector<24x128xf32>
    %31 = vector.shape_cast %28 : vector<24x128xf32> to vector<1x24x128xf32>
    tpu.vector_store %arg5[%c1_22, %c24_23, %c0_24], %31 {strides = array<i32>} : memref<4x72x128xf32, #tpu.memory_space<vmem>>, vector<1x24x128xf32>,
    %32 = vector.extract_strided_slice %23 {offsets = [48, 0], sizes = [24, 128], strides = [1, 1]} : vector<96x128xf32> to vector<24x128xf32>
    %c2_25 = arith.constant 2 : index
    %c24_26 = arith.constant 24 : index
    %c0_27 = arith.constant 0 : index
    %33 = vector.load %arg5[%c2_25, %c24_26, %c0_27] : memref<4x72x128xf32, #tpu.memory_space<vmem>>, vector<1x24x128xf32>
    %34 = vector.shape_cast %33 : vector<1x24x128xf32> to vector<24x128xf32>
    %35 = vector.shape_cast %32 : vector<24x128xf32> to vector<1x24x128xf32>
    tpu.vector_store %arg5[%c2_25, %c24_26, %c0_27], %35 {strides = array<i32>} : memref<4x72x128xf32, #tpu.memory_space<vmem>>, vector<1x24x128xf32>,
    %36 = vector.extract_strided_slice %23 {offsets = [72, 0], sizes = [24, 128], strides = [1, 1]} : vector<96x128xf32> to vector<24x128xf32>
    %c3_28 = arith.constant 3 : index
    %c24_29 = arith.constant 24 : index
    %c0_30 = arith.constant 0 : index
    %37 = vector.load %arg5[%c3_28, %c24_29, %c0_30] : memref<4x72x128xf32, #tpu.memory_space<vmem>>, vector<1x24x128xf32>
    %38 = vector.shape_cast %37 : vector<1x24x128xf32> to vector<24x128xf32>
    %39 = vector.shape_cast %36 : vector<24x128xf32> to vector<1x24x128xf32>
    tpu.vector_store %arg5[%c3_28, %c24_29, %c0_30], %39 {strides = array<i32>} : memref<4x72x128xf32, #tpu.memory_space<vmem>>, vector<1x24x128xf32>,
    %c0_31 = arith.constant 0 : index
    %c2_32 = arith.constant 2 : index
    %c0_33 = arith.constant 0 : index
    %c0_34 = arith.constant 0 : index
    %40 = vector.load %arg1[%c0_31, %c2_32, %c0_33, %c0_34] : memref<1x3x96x80xf32, #tpu.memory_space<vmem>>, vector<1x1x96x80xf32>
    %41 = vector.shape_cast %40 : vector<1x1x96x80xf32> to vector<96x80xf32>
    %cst_35 = arith.constant dense<0.000000e+00> : vector<96x128xf32>
    %42 = tpu.matmul %41, %1, %cst_35 {dimension_numbers = #tpu.dot_dimension_numbers<[1], [0], [0], [1], [0, 0, 1, 1], [], []>} : vector<96x80xf32>, vector<80x128xf32>, vector<96x128xf32> -> vector<96x128xf32>
    %43 = vector.extract_strided_slice %42 {offsets = [0, 0], sizes = [24, 128], strides = [1, 1]} : vector<96x128xf32> to vector<24x128xf32>
    %c0_36 = arith.constant 0 : index
    %c48 = arith.constant 48 : index
    %c0_37 = arith.constant 0 : index
    %44 = vector.load %arg5[%c0_36, %c48, %c0_37] : memref<4x72x128xf32, #tpu.memory_space<vmem>>, vector<1x24x128xf32>
    %45 = vector.shape_cast %44 : vector<1x24x128xf32> to vector<24x128xf32>
    %46 = vector.shape_cast %43 : vector<24x128xf32> to vector<1x24x128xf32>
    tpu.vector_store %arg5[%c0_36, %c48, %c0_37], %46 {strides = array<i32>} : memref<4x72x128xf32, #tpu.memory_space<vmem>>, vector<1x24x128xf32>,
    %47 = vector.extract_strided_slice %42 {offsets = [24, 0], sizes = [24, 128], strides = [1, 1]} : vector<96x128xf32> to vector<24x128xf32>
    %c1_38 = arith.constant 1 : index
    %c48_39 = arith.constant 48 : index
    %c0_40 = arith.constant 0 : index
    %48 = vector.load %arg5[%c1_38, %c48_39, %c0_40] : memref<4x72x128xf32, #tpu.memory_space<vmem>>, vector<1x24x128xf32>
    %49 = vector.shape_cast %48 : vector<1x24x128xf32> to vector<24x128xf32>
    %50 = vector.shape_cast %47 : vector<24x128xf32> to vector<1x24x128xf32>
    tpu.vector_store %arg5[%c1_38, %c48_39, %c0_40], %50 {strides = array<i32>} : memref<4x72x128xf32, #tpu.memory_space<vmem>>, vector<1x24x128xf32>,
    %51 = vector.extract_strided_slice %42 {offsets = [48, 0], sizes = [24, 128], strides = [1, 1]} : vector<96x128xf32> to vector<24x128xf32>
    %c2_41 = arith.constant 2 : index
    %c48_42 = arith.constant 48 : index
    %c0_43 = arith.constant 0 : index
    %52 = vector.load %arg5[%c2_41, %c48_42, %c0_43] : memref<4x72x128xf32, #tpu.memory_space<vmem>>, vector<1x24x128xf32>
    %53 = vector.shape_cast %52 : vector<1x24x128xf32> to vector<24x128xf32>
    %54 = vector.shape_cast %51 : vector<24x128xf32> to vector<1x24x128xf32>
    tpu.vector_store %arg5[%c2_41, %c48_42, %c0_43], %54 {strides = array<i32>} : memref<4x72x128xf32, #tpu.memory_space<vmem>>, vector<1x24x128xf32>,
    %55 = vector.extract_strided_slice %42 {offsets = [72, 0], sizes = [24, 128], strides = [1, 1]} : vector<96x128xf32> to vector<24x128xf32>
    %c3_44 = arith.constant 3 : index
    %c48_45 = arith.constant 48 : index
    %c0_46 = arith.constant 0 : index
    %56 = vector.load %arg5[%c3_44, %c48_45, %c0_46] : memref<4x72x128xf32, #tpu.memory_space<vmem>>, vector<1x24x128xf32>
    %57 = vector.shape_cast %56 : vector<1x24x128xf32> to vector<24x128xf32>
    %58 = vector.shape_cast %55 : vector<24x128xf32> to vector<1x24x128xf32>
    tpu.vector_store %arg5[%c3_44, %c48_45, %c0_46], %58 {strides = array<i32>} : memref<4x72x128xf32, #tpu.memory_space<vmem>>, vector<1x24x128xf32>,
    %c0_47 = arith.constant 0 : index
    %c0_48 = arith.constant 0 : index
    %c0_49 = arith.constant 0 : index
    %59 = vector.load %arg2[%c0_47, %c0_48, %c0_49] : memref<1x24x72xf32, #tpu.memory_space<vmem>>, vector<1x24x72xf32>
    %60 = vector.shape_cast %59 : vector<1x24x72xf32> to vector<24x72xf32>
    %c0_50 = arith.constant 0 : index
    %c0_51 = arith.constant 0 : index
    %c0_52 = arith.constant 0 : index
    %61 = vector.load %arg5[%c0_50, %c0_51, %c0_52] : memref<4x72x128xf32, #tpu.memory_space<vmem>>, vector<1x72x128xf32>
    %62 = vector.shape_cast %61 : vector<1x72x128xf32> to vector<72x128xf32>
    %cst_53 = arith.constant dense<0.000000e+00> : vector<24x128xf32>
    %63 = tpu.matmul %60, %62, %cst_53 {dimension_numbers = #tpu.dot_dimension_numbers<[1], [0], [0], [1], [0, 0, 1, 1], [], []>} : vector<24x72xf32>, vector<72x128xf32>, vector<24x128xf32> -> vector<24x128xf32>
    %c0_54 = arith.constant 0 : index
    %c0_55 = arith.constant 0 : index
    %c0_56 = arith.constant 0 : index
    %c0_57 = arith.constant 0 : index
    %64 = vector.load %arg4[%c0_54, %c0_55, %c0_56, %c0_57] : memref<1x4x24x128xf32, #tpu.memory_space<vmem>>, vector<1x1x24x128xf32>
    %65 = vector.shape_cast %64 : vector<1x1x24x128xf32> to vector<24x128xf32>
    %66 = vector.shape_cast %63 : vector<24x128xf32> to vector<1x1x24x128xf32>
    tpu.vector_store %arg4[%c0_54, %c0_55, %c0_56, %c0_57], %66 {strides = array<i32>} : memref<1x4x24x128xf32, #tpu.memory_space<vmem>>, vector<1x1x24x128xf32>,
    %c1_58 = arith.constant 1 : index
    %c0_59 = arith.constant 0 : index
    %c0_60 = arith.constant 0 : index
    %67 = vector.load %arg5[%c1_58, %c0_59, %c0_60] : memref<4x72x128xf32, #tpu.memory_space<vmem>>, vector<1x72x128xf32>
    %68 = vector.shape_cast %67 : vector<1x72x128xf32> to vector<72x128xf32>
    %cst_61 = arith.constant dense<0.000000e+00> : vector<24x128xf32>
    %69 = tpu.matmul %60, %68, %cst_61 {dimension_numbers = #tpu.dot_dimension_numbers<[1], [0], [0], [1], [0, 0, 1, 1], [], []>} : vector<24x72xf32>, vector<72x128xf32>, vector<24x128xf32> -> vector<24x128xf32>
    %c0_62 = arith.constant 0 : index
    %c1_63 = arith.constant 1 : index
    %c0_64 = arith.constant 0 : index
    %c0_65 = arith.constant 0 : index
    %70 = vector.load %arg4[%c0_62, %c1_63, %c0_64, %c0_65] : memref<1x4x24x128xf32, #tpu.memory_space<vmem>>, vector<1x1x24x128xf32>
    %71 = vector.shape_cast %70 : vector<1x1x24x128xf32> to vector<24x128xf32>
    %72 = vector.shape_cast %69 : vector<24x128xf32> to vector<1x1x24x128xf32>
    tpu.vector_store %arg4[%c0_62, %c1_63, %c0_64, %c0_65], %72 {strides = array<i32>} : memref<1x4x24x128xf32, #tpu.memory_space<vmem>>, vector<1x1x24x128xf32>,
    %c2_66 = arith.constant 2 : index
    %c0_67 = arith.constant 0 : index
    %c0_68 = arith.constant 0 : index
    %73 = vector.load %arg5[%c2_66, %c0_67, %c0_68] : memref<4x72x128xf32, #tpu.memory_space<vmem>>, vector<1x72x128xf32>
    %74 = vector.shape_cast %73 : vector<1x72x128xf32> to vector<72x128xf32>
    %cst_69 = arith.constant dense<0.000000e+00> : vector<24x128xf32>
    %75 = tpu.matmul %60, %74, %cst_69 {dimension_numbers = #tpu.dot_dimension_numbers<[1], [0], [0], [1], [0, 0, 1, 1], [], []>} : vector<24x72xf32>, vector<72x128xf32>, vector<24x128xf32> -> vector<24x128xf32>
    %c0_70 = arith.constant 0 : index
    %c2_71 = arith.constant 2 : index
    %c0_72 = arith.constant 0 : index
    %c0_73 = arith.constant 0 : index
    %76 = vector.load %arg4[%c0_70, %c2_71, %c0_72, %c0_73] : memref<1x4x24x128xf32, #tpu.memory_space<vmem>>, vector<1x1x24x128xf32>
    %77 = vector.shape_cast %76 : vector<1x1x24x128xf32> to vector<24x128xf32>
    %78 = vector.shape_cast %75 : vector<24x128xf32> to vector<1x1x24x128xf32>
    tpu.vector_store %arg4[%c0_70, %c2_71, %c0_72, %c0_73], %78 {strides = array<i32>} : memref<1x4x24x128xf32, #tpu.memory_space<vmem>>, vector<1x1x24x128xf32>,
    %c3_74 = arith.constant 3 : index
    %c0_75 = arith.constant 0 : index
    %c0_76 = arith.constant 0 : index
    %79 = vector.load %arg5[%c3_74, %c0_75, %c0_76] : memref<4x72x128xf32, #tpu.memory_space<vmem>>, vector<1x72x128xf32>
    %80 = vector.shape_cast %79 : vector<1x72x128xf32> to vector<72x128xf32>
    %cst_77 = arith.constant dense<0.000000e+00> : vector<24x128xf32>
    %81 = tpu.matmul %60, %80, %cst_77 {dimension_numbers = #tpu.dot_dimension_numbers<[1], [0], [0], [1], [0, 0, 1, 1], [], []>} : vector<24x72xf32>, vector<72x128xf32>, vector<24x128xf32> -> vector<24x128xf32>
    %c0_78 = arith.constant 0 : index
    %c3_79 = arith.constant 3 : index
    %c0_80 = arith.constant 0 : index
    %c0_81 = arith.constant 0 : index
    %82 = vector.load %arg4[%c0_78, %c3_79, %c0_80, %c0_81] : memref<1x4x24x128xf32, #tpu.memory_space<vmem>>, vector<1x1x24x128xf32>
    %83 = vector.shape_cast %82 : vector<1x1x24x128xf32> to vector<24x128xf32>
    %84 = vector.shape_cast %81 : vector<24x128xf32> to vector<1x1x24x128xf32>
    tpu.vector_store %arg4[%c0_78, %c3_79, %c0_80, %c0_81], %84 {strides = array<i32>} : memref<1x4x24x128xf32, #tpu.memory_space<vmem>>, vector<1x1x24x128xf32>,
    return
  }
  func.func @transform_0(%arg0: i32) -> (i32, i32, i32, i32) {
    %c0_i32 = arith.constant 0 : i32
    %c0_i32_0 = arith.constant 0 : i32
    %c0_i32_1 = arith.constant 0 : i32
    %c0_i32_2 = arith.constant 0 : i32
    return %arg0, %c0_i32, %c0_i32_0, %c0_i32_1 : i32, i32, i32, i32
  }
  func.func @transform_1(%arg0: i32) -> (i32, i32, i32) {
    %c0_i32 = arith.constant 0 : i32
    %c0_i32_0 = arith.constant 0 : i32
    %c0_i32_1 = arith.constant 0 : i32
    return %arg0, %c0_i32, %c0_i32_0 : i32, i32, i32
  }
  func.func @transform_2(%arg0: i32) -> (i32, i32, i32) {
    %c0_i32 = arith.constant 0 : i32
    %c0_i32_0 = arith.constant 0 : i32
    %c0_i32_1 = arith.constant 0 : i32
    return %arg0, %c0_i32, %c0_i32_0 : i32, i32, i32
  }
  func.func @transform_3(%arg0: i32) -> (i32, i32, i32, i32) {
    %c0_i32 = arith.constant 0 : i32
    %c0_i32_0 = arith.constant 0 : i32
    %c0_i32_1 = arith.constant 0 : i32
    %c0_i32_2 = arith.constant 0 : i32
    return %arg0, %c0_i32, %c0_i32_0, %c0_i32_1 : i32, i32, i32, i32
  }
}

</mosaic_0001>

<llo_original>
// kernel: model_forward.1
$region0: #{model_forward.1}
  #allocation0 [shape = 'u32[]', space=smem, size = 0x4, offset = 0x4, fixed_abs, tag = 'smem constant byte address 0x4 - core index']
  #allocation1 [shape = 'u32[144,128]{1,0:T(1,128)}', space=vmem, size = 0x12000, scoped, tag = 'internal scratch']
  #allocation2 [shape = 'f32[4,72,128]{2,1,0:T(8,128)}', space=vmem, size = 0x24000, scoped, tag = 'scratch operand']
  %s0 = inlined_call_operand.vmem [shape: f32[3,3,96,80], index: 0, kind: input, shape index: {}]
  %s1 = inlined_call_operand.vmem [shape: f32[3,24,72], index: 1, kind: input, shape index: {}]
  %s2 = inlined_call_operand.vmem [shape: f32[3,80,128], index: 2, kind: input, shape index: {}]
  %s3 = inlined_call_operand.vmem [shape: f32[3,4,24,128], index: 3, kind: output, shape index: {}]
  %s4 = sld [smem:[#allocation0]]
  $region45: #{model_forward.1} parent=0
    _
  %s6 = ssub.s32 1, %s4
  %s7 = scalar_select 0, %s6, %s4
  loop: start=0, step=1, limit=5
  $region2: #{model_forward.1} parent=0 // loop_pre_header
    _
  $region3: #{model_forward.1} parent=0 // loop_header
    %s9 = sphi 0, %s13
    %p10 = scmp.ge.s32.totalorder %s9, 5
    %s19 = sphi 0, %s21
    %s22 = sphi 0, %s19
    %s23 = sphi 0, %s22
    %s39 = sphi 0, %s23
    %s45 = sphi 0, %s47
    %s48 = sphi 0, %s45
    %s49 = sphi 0, %s48
    %s65 = sphi 0, %s49
    %s71 = sphi 0, %s73
    %s74 = sphi 0, %s71
    %s75 = sphi 0, %s74
    %s91 = sphi 0, %s75
    %s97 = sphi 0, %s99
    %s100 = sphi 0, %s97
    %s101 = sphi 0, %s100
    %s117 = sphi 0, %s101
  $region4: #{model_forward.1} parent=0 // loop_header_branch
    %12 = sbr.rel (%p10) target = $region8
  $region5: #{model_forward.1} parent=0 // loop_body
    %s14 = ssub.s32 %s9, 1
    %s15 = ssub.s32 %s9, 2
    %s16 = sadd.s32 %s9, 1
    %s17 = ssub.s32 %s9, %s16
    %p18 = scmp.eq.s32.totalorder %s17, 0
    %s20 = sadd.s32 %s19, 1
    %s21 = scalar_select %p18, %s19, %s20
    %p24 = pneg %p18
    %p25 = scmp.eq.s32.totalorder %s9, 2
    %p26 = por %p24, %p25
    %p27 = scmp.ne.s32.totalorder %s19, %s22
    %p28 = scmp.eq.s32.totalorder %s9, 0
    %p29 = por %p27, %p28
    %p30 = scmp.ne.s32.totalorder %s19, %s22
    %p31 = scmp.eq.s32.totalorder %s14, 2
    %p32 = por %p30, %p31
    %p33 = scmp.ne.s32.totalorder %s22, %s23
    %p34 = scmp.eq.s32.totalorder %s14, 0
    %p35 = por %p33, %p34
    %p36 = scmp.ne.s32.totalorder %s22, %s23
    %p37 = scmp.eq.s32.totalorder %s15, 2
    %p38 = por %p36, %p37
    %p40 = scmp.ne.s32.totalorder %s23, %s39
    %p41 = scmp.eq.s32.totalorder %s15, 0
    %p42 = por %p40, %p41
    %s43 = ssub.s32 %s9, %s16
    %p44 = scmp.eq.s32.totalorder %s43, 0
    %s46 = sadd.s32 %s45, 1
    %s47 = scalar_select %p44, %s45, %s46
    %p50 = pneg %p44
    %p51 = scmp.eq.s32.totalorder %s9, 2
    %p52 = por %p50, %p51
    %p53 = scmp.ne.s32.totalorder %s45, %s48
    %p54 = scmp.eq.s32.totalorder %s9, 0
    %p55 = por %p53, %p54
    %p56 = scmp.ne.s32.totalorder %s45, %s48
    %p57 = scmp.eq.s32.totalorder %s14, 2
    %p58 = por %p56, %p57
    %p59 = scmp.ne.s32.totalorder %s48, %s49
    %p60 = scmp.eq.s32.totalorder %s14, 0
    %p61 = por %p59, %p60
    %p62 = scmp.ne.s32.totalorder %s48, %s49
    %p63 = scmp.eq.s32.totalorder %s15, 2
    %p64 = por %p62, %p63
    %p66 = scmp.ne.s32.totalorder %s49, %s65
    %p67 = scmp.eq.s32.totalorder %s15, 0
    %p68 = por %p66, %p67
    %s69 = ssub.s32 %s9, %s16
    %p70 = scmp.eq.s32.totalorder %s69, 0
    %s72 = sadd.s32 %s71, 1
    %s73 = scalar_select %p70, %s71, %s72
    %p76 = pneg %p70
    %p77 = scmp.eq.s32.totalorder %s9, 2
    %p78 = por %p76, %p77
    %p79 = scmp.ne.s32.totalorder %s71, %s74
    %p80 = scmp.eq.s32.totalorder %s9, 0
    %p81 = por %p79, %p80
    %p82 = scmp.ne.s32.totalorder %s71, %s74
    %p83 = scmp.eq.s32.totalorder %s14, 2
    %p84 = por %p82, %p83
    %p85 = scmp.ne.s32.totalorder %s74, %s75
    %p86 = scmp.eq.s32.totalorder %s14, 0
    %p87 = por %p85, %p86
    %p88 = scmp.ne.s32.totalorder %s74, %s75
    %p89 = scmp.eq.s32.totalorder %s15, 2
    %p90 = por %p88, %p89
    %p92 = scmp.ne.s32.totalorder %s75, %s91
    %p93 = scmp.eq.s32.totalorder %s15, 0
    %p94 = por %p92, %p93
    %s95 = ssub.s32 %s9, %s16
    %p96 = scmp.eq.s32.totalorder %s95, 0
    %s98 = sadd.s32 %s97, 1
    %s99 = scalar_select %p96, %s97, %s98
    %p102 = pneg %p96
    %p103 = scmp.eq.s32.totalorder %s9, 2
    %p104 = por %p102, %p103
    %p105 = scmp.ne.s32.totalorder %s97, %s100
    %p106 = scmp.eq.s32.totalorder %s9, 0
    %p107 = por %p105, %p106
    %p108 = scmp.ne.s32.totalorder %s97, %s100
    %p109 = scmp.eq.s32.totalorder %s14, 2
    %p110 = por %p108, %p109
    %p111 = scmp.ne.s32.totalorder %s100, %s101
    %p112 = scmp.eq.s32.totalorder %s14, 0
    %p113 = por %p111, %p112
    %p114 = scmp.ne.s32.totalorder %s100, %s101
    %p115 = scmp.eq.s32.totalorder %s15, 2
    %p116 = por %p114, %p115
    %p118 = scmp.ne.s32.totalorder %s101, %s117
    %p119 = scmp.eq.s32.totalorder %s15, 0
    %p120 = por %p118, %p119
    %p121 = scmp.le.s32.totalorder 1, %s9
    %p122 = scmp.lt.s32.totalorder %s9, 4
    %p123 = pnand %p121, %p122
    %p124 = pneg %p123
    // Predicated region
    $region9: #{model_forward.1} parent=5 // pred_check
      _
    $region10: #{model_forward.1} parent=5 // pred_check_branch
      %126 = sbr.rel (%p123) target = $region12
    $region11: #{model_forward.1} parent=5 // pred_region
      %s127 = ssub.s32 %s9, 1
    $region12: #{model_forward.1} parent=5 // pred_fallthru
      _
    %p128 = scmp.lt.s32.totalorder %s9, 3
    // Predicated region
    $region13: #{model_forward.1} parent=5 // pred_check
      %p129 = pneg %p128
    $region14: #{model_forward.1} parent=5 // pred_check_branch
      %131 = sbr.rel (%p129) target = $region16
    $region15: #{model_forward.1} parent=5 // pred_region
      // Predicated region
      $region17: #{model_forward.1} parent=15 // pred_check
        %p132 = pneg %p29
      $region18: #{model_forward.1} parent=15 // pred_check_branch
        %134 = sbr.rel (%p132) target = $region20
      $region19: #{model_forward.1} parent=15 // pred_region
        %p135 = scmp.lt.s32.totalorder %s9, 2
        %s136 = scalar_select %p135, %s9, 2
        %s137 = smul.addr %s136, 36
        %s138 = smul.addr %s137, 8
        %s139 = scalar_lea.vmem %s0, %s138
      $region20: #{model_forward.1} parent=15 // pred_fallthru
        _
      // Predicated region
      $region21: #{model_forward.1} parent=15 // pred_check
        %p140 = pneg %p55
      $region22: #{model_forward.1} parent=15 // pred_check_branch
        %142 = sbr.rel (%p140) target = $region24
      $region23: #{model_forward.1} parent=15 // pred_region
        %p143 = scmp.lt.s32.totalorder %s9, 2
        %s144 = scalar_select %p143, %s9, 2
        %s145 = smul.addr %s144, 3
        %s146 = smul.addr %s145, 8
        %s147 = scalar_lea.vmem %s1, %s146
      $region24: #{model_forward.1} parent=15 // pred_fallthru
        _
      // Predicated region
      $region25: #{model_forward.1} parent=15 // pred_check
        %p148 = pneg %p81
      $region26: #{model_forward.1} parent=15 // pred_check_branch
        %150 = sbr.rel (%p148) target = $region28
      $region27: #{model_forward.1} parent=15 // pred_region
        %p151 = scmp.lt.s32.totalorder %s9, 2
        %s152 = scalar_select %p151, %s9, 2
        %s153 = smul.addr %s152, 10
        %s154 = smul.addr %s153, 8
        %s155 = scalar_lea.vmem %s2, %s154
      $region28: #{model_forward.1} parent=15 // pred_fallthru
        _
    $region16: #{model_forward.1} parent=5 // pred_fallthru
      _
    %p156 = scmp.le.s32.totalorder 1, %s9
    %p157 = scmp.lt.s32.totalorder %s9, 4
    %p158 = pnand %p156, %p157
    %p159 = pneg %p158
    // Predicated region
    $region29: #{model_forward.1} parent=5 // pred_check
      _
    $region30: #{model_forward.1} parent=5 // pred_check_branch
      %161 = sbr.rel (%p158) target = $region32
    $region31: #{model_forward.1} parent=5 // pred_region
      %s162 = ssub.s32 %s9, 1
      %p163 = scmp.lt.s32.totalorder %s14, 2
      %s164 = scalar_select %p163, %s14, 2
      %s165 = smul.addr %s164, 36
      %s166 = smul.addr %s165, 8
      %s167 = scalar_lea.vmem %s0, %s166
      %p168 = pneg %p35
      %p169 = pneg %p32
      %p170 = scmp.lt.s32.totalorder %s14, 2
      %s171 = scalar_select %p170, %s14, 2
      %s172 = smul.addr %s171, 3
      %s173 = smul.addr %s172, 8
      %s174 = scalar_lea.vmem %s1, %s173
      %p175 = pneg %p61
      %p176 = pneg %p58
      %p177 = scmp.lt.s32.totalorder %s14, 2
      %s178 = scalar_select %p177, %s14, 2
      %s179 = smul.addr %s178, 10
      %s180 = smul.addr %s179, 8
      %s181 = scalar_lea.vmem %s2, %s180
      %p182 = pneg %p87
      %p183 = pneg %p84
      %p184 = pneg %p113
      %p185 = pneg %p110
      %p186 = scmp.lt.s32.totalorder %s14, 2
      %s187 = scalar_select %p186, %s14, 2
      %s188 = smul.addr %s187, 12
      %s189 = smul.addr %s188, 8
      %s190 = scalar_lea.vmem %s3, %s189
      %p191 = scmp.lt.s32.totalorder %s14, 2
      %s192 = scalar_select %p191, %s14, 2
      %s193 = smul.addr %s192, 36
      %s194 = smul.addr %s193, 8
      %s195 = scalar_lea.vmem %s0, %s194
      %p196 = scmp.lt.s32.totalorder %s14, 2
      %s197 = scalar_select %p196, %s14, 2
      %s198 = smul.addr %s197, 3
      %s199 = smul.addr %s198, 8
      %s200 = scalar_lea.vmem %s1, %s199
      %p201 = scmp.lt.s32.totalorder %s14, 2
      %s202 = scalar_select %p201, %s14, 2
      %s203 = smul.addr %s202, 10
      %s204 = smul.addr %s203, 8
      %s205 = scalar_lea.vmem %s2, %s204
      %p206 = scmp.lt.s32.totalorder %s14, 2
      %s207 = scalar_select %p206, %s14, 2
      %s208 = smul.addr %s207, 12
      %s209 = smul.addr %s208, 8
      %s210 = scalar_lea.vmem %s3, %s209
      %v211 = vld [vmem:[%s205] sm:$0xff]
      %v212 = vld [vmem:[%s205 + $0x8] sm:$0xff]
      %v213 = vld [vmem:[%s205 + $0x10] sm:$0xff]
      %v214 = vld [vmem:[%s205 + $0x18] sm:$0xff]
      %v215 = vld [vmem:[%s205 + $0x20] sm:$0xff]
      %v216 = vld [vmem:[%s205 + $0x28] sm:$0xff]
      %v217 = vld [vmem:[%s205 + $0x30] sm:$0xff]
      %v218 = vld [vmem:[%s205 + $0x38] sm:$0xff]
      %v219 = vld [vmem:[%s205 + $0x40] sm:$0xff]
      %v220 = vld [vmem:[%s205 + $0x48] sm:$0xff]
      %v221 = vld [vmem:[%s195] sm:$0xff]
      %v222 = vld [vmem:[%s195 + $0x8] sm:$0xff]
      %v223 = vld [vmem:[%s195 + $0x10] sm:$0xff]
      %v224 = vld [vmem:[%s195 + $0x18] sm:$0xff]
      %v225 = vld [vmem:[%s195 + $0x20] sm:$0xff]
      %v226 = vld [vmem:[%s195 + $0x28] sm:$0xff]
      %v227 = vld [vmem:[%s195 + $0x30] sm:$0xff]
      %v228 = vld [vmem:[%s195 + $0x38] sm:$0xff]
      %v229 = vld [vmem:[%s195 + $0x40] sm:$0xff]
      %v230 = vld [vmem:[%s195 + $0x48] sm:$0xff]
      %v231 = vld [vmem:[%s195 + $0x50] sm:$0xff]
      %v232 = vld [vmem:[%s195 + $0x58] sm:$0xff]
      %vm233 = vcmask 654336
      %v235 = vsel %vm233, %v221, 0
      %v238 = vsel %vm233, %v222, 0
      %v241 = vsel %vm233, %v223, 0
      %v244 = vsel %vm233, %v224, 0
      %v247 = vsel %vm233, %v225, 0
      %v250 = vsel %vm233, %v226, 0
      %v253 = vsel %vm233, %v227, 0
      %v256 = vsel %vm233, %v228, 0
      %v259 = vsel %vm233, %v229, 0
      %v262 = vsel %vm233, %v230, 0
      %v265 = vsel %vm233, %v231, 0
      %v268 = vsel %vm233, %v232, 0
      %270 = vmatprep.subr.mxu0 0.0
      %271 = vmatpush1.msra.mxu0 %v211
      %272 = vmatprep.subr.mxu0 0.0
      %273 = vmatpush1.msra.mxu0 %v212
      %274 = vmatprep.subr.mxu0 0.0
      %275 = vmatpush1.msra.mxu0 %v213
      %276 = vmatprep.subr.mxu0 0.0
      %277 = vmatpush1.msra.mxu0 %v214
      %278 = vmatprep.subr.mxu0 0.0
      %279 = vmatpush1.msra.mxu0 %v215
      %280 = vmatprep.subr.mxu0 0.0
      %281 = vmatpush1.msra.mxu0 %v216
      %282 = vmatprep.subr.mxu0 0.0
      %283 = vmatpush1.msra.mxu0 %v217
      %284 = vmatprep.subr.mxu0 0.0
      %285 = vmatpush1.msra.mxu0 %v218
      %286 = vmatprep.subr.mxu0 0.0
      %287 = vmatpush1.msra.mxu0 %v219
      %288 = vmatprep.subr.mxu0 0.0
      %289 = vmatpush1.msra.mxu0 %v220
      %290 = vmatprep.subr.mxu0 0.0
      %291 = vmatpush1.msra.mxu0 0.0
      %292 = vmatprep.subr.mxu0 0.0
      %293 = vmatpush1.msra.mxu0 0.0
      %294 = vmatprep.subr.mxu0 0.0
      %295 = vmatpush1.msra.mxu0 0.0
      %296 = vmatprep.subr.mxu0 0.0
      %297 = vmatpush1.msra.mxu0 0.0
      %298 = vmatprep.subr.mxu0 0.0
      %299 = vmatpush1.msra.mxu0 0.0
      %300 = vmatprep.subr.mxu0 0.0
      %301 = vmatpush1.msra.mxu0 0.0
      %302 = vmatprep.subr.mxu0 0.0
      %303 = vmatpush1.msra.mxu0 0.0
      %304 = vmatprep.subr.mxu0 0.0
      %305 = vmatpush1.msra.mxu0 0.0
      %306 = vmatprep.subr.mxu0 0.0
      %307 = vmatpush1.msra.mxu0 0.0
      %308 = vmatprep.subr.mxu0 0.0
      %309 = vmatpush1.msra.mxu0 0.0
      %310 = vmatprep.subr.mxu0 0.0
      %311 = vmatpush1.msra.mxu0 0.0
      %312 = vmatprep.subr.mxu0 0.0
      %313 = vmatpush1.msra.mxu0 0.0
      %314 = vmatprep.subr.mxu0 0.0
      %315 = vmatpush1.msra.mxu0 0.0
      %316 = vmatprep.subr.mxu0 0.0
      %317 = vmatpush1.msra.mxu0 0.0
      %318 = vmatprep.subr.mxu0 0.0
      %319 = vmatpush1.msra.mxu0 0.0
      %320 = vmatprep.subr.mxu0 0.0
      %321 = vmatpush1.msra.mxu0 0.0
      %322 = vmatprep.subr.mxu0 0.0
      %323 = vmatpush1.msra.mxu0 0.0
      %324 = vmatprep.subr.mxu0 0.0
      %325 = vmatpush1.msra.mxu0 0.0
      %326 = vmatprep.subr.mxu0 0.0
      %327 = vmatpush1.msra.mxu0 0.0
      %328 = vmatprep.subr.mxu0 0.0
      %329 = vmatpush1.msra.mxu0 0.0
      %330 = vmatprep.subr.mxu0 0.0
      %331 = vmatpush1.msra.mxu0 0.0
      %332 = vmatprep.subr.mxu0 0.0
      %333 = vmatpush1.msra.mxu0 0.0
      %334 = vmatprep.mubr.f32.mxu0 0.0
      %335 = vmatmul.mubr.f32.gmra.mrb[0].mxu0 %v235
      %v336 = vpop.f32.mrb[0].mxu0
      %v337 = vadd.f32 0.0, %v336
      %v338 = vpop.f32.mrb[0].mxu0
      %339 = vmatprep.mubr.f32.mxu0 0.0
      %340 = vmatmul.mubr.f32.gmra.mrb[0].mxu0 %v238
      %v341 = vpop.f32.mrb[0].mxu0
      %v342 = vadd.f32 0.0, %v341
      %v343 = vpop.f32.mrb[0].mxu0
      %344 = vmatprep.mubr.f32.mxu0 0.0
      %345 = vmatmul.mubr.f32.gmra.mrb[0].mxu0 %v241
      %v346 = vpop.f32.mrb[0].mxu0
      %v347 = vadd.f32 0.0, %v346
      %v348 = vpop.f32.mrb[0].mxu0
      %349 = vmatprep.mubr.f32.mxu0 0.0
      %350 = vmatmul.mubr.f32.gmra.mrb[0].mxu0 %v244
      %v351 = vpop.f32.mrb[0].mxu0
      %v352 = vadd.f32 0.0, %v351
      %v353 = vpop.f32.mrb[0].mxu0
      %354 = vmatprep.mubr.f32.mxu0 0.0
      %355 = vmatmul.mubr.f32.gmra.mrb[0].mxu0 %v247
      %v356 = vpop.f32.mrb[0].mxu0
      %v357 = vadd.f32 0.0, %v356
      %v358 = vpop.f32.mrb[0].mxu0
      %359 = vmatprep.mubr.f32.mxu0 0.0
      %360 = vmatmul.mubr.f32.gmra.mrb[0].mxu0 %v250
      %v361 = vpop.f32.mrb[0].mxu0
      %v362 = vadd.f32 0.0, %v361
      %v363 = vpop.f32.mrb[0].mxu0
      %364 = vmatprep.mubr.f32.mxu0 0.0
      %365 = vmatmul.mubr.f32.gmra.mrb[0].mxu0 %v253
      %v366 = vpop.f32.mrb[0].mxu0
      %v367 = vadd.f32 0.0, %v366
      %v368 = vpop.f32.mrb[0].mxu0
      %369 = vmatprep.mubr.f32.mxu0 0.0
      %370 = vmatmul.mubr.f32.gmra.mrb[0].mxu0 %v256
      %v371 = vpop.f32.mrb[0].mxu0
      %v372 = vadd.f32 0.0, %v371
      %v373 = vpop.f32.mrb[0].mxu0
      %374 = vmatprep.mubr.f32.mxu0 0.0
      %375 = vmatmul.mubr.f32.gmra.mrb[0].mxu0 %v259
      %v376 = vpop.f32.mrb[0].mxu0
      %v377 = vadd.f32 0.0, %v376
      %v378 = vpop.f32.mrb[0].mxu0
      %379 = vmatprep.mubr.f32.mxu0 0.0
      %380 = vmatmul.mubr.f32.gmra.mrb[0].mxu0 %v262
      %v381 = vpop.f32.mrb[0].mxu0
      %v382 = vadd.f32 0.0, %v381
      %v383 = vpop.f32.mrb[0].mxu0
      %384 = vmatprep.mubr.f32.mxu0 0.0
      %385 = vmatmul.mubr.f32.gmra.mrb[0].mxu0 %v265
      %v386 = vpop.f32.mrb[0].mxu0
      %v387 = vadd.f32 0.0, %v386
      %v388 = vpop.f32.mrb[0].mxu0
      %389 = vmatprep.mubr.f32.mxu0 0.0
      %390 = vmatmul.mubr.f32.gmra.mrb[0].mxu0 %v268
      %v391 = vpop.f32.mrb[0].mxu0
      %v392 = vadd.f32 0.0, %v391
      %v393 = vpop.f32.mrb[0].mxu0
      %394 = vdwg.mxu0
      %395 = vst [vmem:[#allocation2] sm:$0xff] %v337
      %396 = vst [vmem:[#allocation2 + $0x8] sm:$0xff] %v342
      %397 = vst [vmem:[#allocation2 + $0x10] sm:$0xff] %v347
      %s398 = scalar_lea.vmem [#allocation2], 72
      %399 = vst [vmem:[%s398] sm:$0xff] %v352
      %400 = vst [vmem:[%s398 + $0x8] sm:$0xff] %v357
      %401 = vst [vmem:[%s398 + $0x10] sm:$0xff] %v362
      %s402 = scalar_lea.vmem [#allocation2], 144
      %403 = vst [vmem:[%s402] sm:$0xff] %v367
      %404 = vst [vmem:[%s402 + $0x8] sm:$0xff] %v372
      %405 = vst [vmem:[%s402 + $0x10] sm:$0xff] %v377
      %s406 = scalar_lea.vmem [#allocation2], 216
      %407 = vst [vmem:[%s406] sm:$0xff] %v382
      %408 = vst [vmem:[%s406 + $0x8] sm:$0xff] %v387
      %409 = vst [vmem:[%s406 + $0x10] sm:$0xff] %v392
      %s410 = scalar_lea.vmem %s195, 96
      %v411 = vld [vmem:[%s410] sm:$0xff]
      %v412 = vld [vmem:[%s410 + $0x8] sm:$0xff]
      %v413 = vld [vmem:[%s410 + $0x10] sm:$0xff]
      %v414 = vld [vmem:[%s410 + $0x18] sm:$0xff]
      %v415 = vld [vmem:[%s410 + $0x20] sm:$0xff]
      %v416 = vld [vmem:[%s410 + $0x28] sm:$0xff]
      %v417 = vld [vmem:[%s410 + $0x30] sm:$0xff]
      %v418 = vld [vmem:[%s410 + $0x38] sm:$0xff]
      %v419 = vld [vmem:[%s410 + $0x40] sm:$0xff]
      %v420 = vld [vmem:[%s410 + $0x48] sm:$0xff]
      %v421 = vld [vmem:[%s410 + $0x50] sm:$0xff]
      %v422 = vld [vmem:[%s410 + $0x58] sm:$0xff]
      %v424 = vsel %vm233, %v411, 0
      %v427 = vsel %vm233, %v412, 0
      %v430 = vsel %vm233, %v413, 0
      %v433 = vsel %vm233, %v414, 0
      %v436 = vsel %vm233, %v415, 0
      %v439 = vsel %vm233, %v416, 0
      %v442 = vsel %vm233, %v417, 0
      %v445 = vsel %vm233, %v418, 0
      %v448 = vsel %vm233, %v419, 0
      %v451 = vsel %vm233, %v420, 0
      %v454 = vsel %vm233, %v421, 0
      %v457 = vsel %vm233, %v422, 0
      %459 = vmatprep.subr.mxu0 0.0
      %460 = vmatpush1.msra.mxu0 %v211
      %461 = vmatprep.subr.mxu0 0.0
      %462 = vmatpush1.msra.mxu0 %v212
      %463 = vmatprep.subr.mxu0 0.0
      %464 = vmatpush1.msra.mxu0 %v213
      %465 = vmatprep.subr.mxu0 0.0
      %466 = vmatpush1.msra.mxu0 %v214
      %467 = vmatprep.subr.mxu0 0.0
      %468 = vmatpush1.msra.mxu0 %v215
      %469 = vmatprep.subr.mxu0 0.0
      %470 = vmatpush1.msra.mxu0 %v216
      %471 = vmatprep.subr.mxu0 0.0
      %472 = vmatpush1.msra.mxu0 %v217
      %473 = vmatprep.subr.mxu0 0.0
      %474 = vmatpush1.msra.mxu0 %v218
      %475 = vmatprep.subr.mxu0 0.0
      %476 = vmatpush1.msra.mxu0 %v219
      %477 = vmatprep.subr.mxu0 0.0
      %478 = vmatpush1.msra.mxu0 %v220
      %479 = vmatprep.subr.mxu0 0.0
      %480 = vmatpush1.msra.mxu0 0.0
      %481 = vmatprep.subr.mxu0 0.0
      %482 = vmatpush1.msra.mxu0 0.0
      %483 = vmatprep.subr.mxu0 0.0
      %484 = vmatpush1.msra.mxu0 0.0
      %485 = vmatprep.subr.mxu0 0.0
      %486 = vmatpush1.msra.mxu0 0.0
      %487 = vmatprep.subr.mxu0 0.0
      %488 = vmatpush1.msra.mxu0 0.0
      %489 = vmatprep.subr.mxu0 0.0
      %490 = vmatpush1.msra.mxu0 0.0
      %491 = vmatprep.subr.mxu0 0.0
      %492 = vmatpush1.msra.mxu0 0.0
      %493 = vmatprep.subr.mxu0 0.0
      %494 = vmatpush1.msra.mxu0 0.0
      %495 = vmatprep.subr.mxu0 0.0
      %496 = vmatpush1.msra.mxu0 0.0
      %497 = vmatprep.subr.mxu0 0.0
      %498 = vmatpush1.msra.mxu0 0.0
      %499 = vmatprep.subr.mxu0 0.0
      %500 = vmatpush1.msra.mxu0 0.0
      %501 = vmatprep.subr.mxu0 0.0
      %502 = vmatpush1.msra.mxu0 0.0
      %503 = vmatprep.subr.mxu0 0.0
      %504 = vmatpush1.msra.mxu0 0.0
      %505 = vmatprep.subr.mxu0 0.0
      %506 = vmatpush1.msra.mxu0 0.0
      %507 = vmatprep.subr.mxu0 0.0
      %508 = vmatpush1.msra.mxu0 0.0
      %509 = vmatprep.subr.mxu0 0.0
      %510 = vmatpush1.msra.mxu0 0.0
      %511 = vmatprep.subr.mxu0 0.0
      %512 = vmatpush1.msra.mxu0 0.0
      %513 = vmatprep.subr.mxu0 0.0
      %514 = vmatpush1.msra.mxu0 0.0
      %515 = vmatprep.subr.mxu0 0.0
      %516 = vmatpush1.msra.mxu0 0.0
      %517 = vmatprep.subr.mxu0 0.0
      %518 = vmatpush1.msra.mxu0 0.0
      %519 = vmatprep.subr.mxu0 0.0
      %520 = vmatpush1.msra.mxu0 0.0
      %521 = vmatprep.subr.mxu0 0.0
      %522 = vmatpush1.msra.mxu0 0.0
      %523 = vmatprep.mubr.f32.mxu0 0.0
      %524 = vmatmul.mubr.f32.gmra.mrb[0].mxu0 %v424
      %v525 = vpop.f32.mrb[0].mxu0
      %v526 = vadd.f32 0.0, %v525
      %v527 = vpop.f32.mrb[0].mxu0
      %528 = vmatprep.mubr.f32.mxu0 0.0
      %529 = vmatmul.mubr.f32.gmra.mrb[0].mxu0 %v427
      %v530 = vpop.f32.mrb[0].mxu0
      %v531 = vadd.f32 0.0, %v530
      %v532 = vpop.f32.mrb[0].mxu0
      %533 = vmatprep.mubr.f32.mxu0 0.0
      %534 = vmatmul.mubr.f32.gmra.mrb[0].mxu0 %v430
      %v535 = vpop.f32.mrb[0].mxu0
      %v536 = vadd.f32 0.0, %v535
      %v537 = vpop.f32.mrb[0].mxu0
      %538 = vmatprep.mubr.f32.mxu0 0.0
      %539 = vmatmul.mubr.f32.gmra.mrb[0].mxu0 %v433
      %v540 = vpop.f32.mrb[0].mxu0
      %v541 = vadd.f32 0.0, %v540
      %v542 = vpop.f32.mrb[0].mxu0
      %543 = vmatprep.mubr.f32.mxu0 0.0
      %544 = vmatmul.mubr.f32.gmra.mrb[0].mxu0 %v436
      %v545 = vpop.f32.mrb[0].mxu0
      %v546 = vadd.f32 0.0, %v545
      %v547 = vpop.f32.mrb[0].mxu0
      %548 = vmatprep.mubr.f32.mxu0 0.0
      %549 = vmatmul.mubr.f32.gmra.mrb[0].mxu0 %v439
      %v550 = vpop.f32.mrb[0].mxu0
      %v551 = vadd.f32 0.0, %v550
      %v552 = vpop.f32.mrb[0].mxu0
      %553 = vmatprep.mubr.f32.mxu0 0.0
      %554 = vmatmul.mubr.f32.gmra.mrb[0].mxu0 %v442
      %v555 = vpop.f32.mrb[0].mxu0
      %v556 = vadd.f32 0.0, %v555
      %v557 = vpop.f32.mrb[0].mxu0
      %558 = vmatprep.mubr.f32.mxu0 0.0
      %559 = vmatmul.mubr.f32.gmra.mrb[0].mxu0 %v445
      %v560 = vpop.f32.mrb[0].mxu0
      %v561 = vadd.f32 0.0, %v560
      %v562 = vpop.f32.mrb[0].mxu0
      %563 = vmatprep.mubr.f32.mxu0 0.0
      %564 = vmatmul.mubr.f32.gmra.mrb[0].mxu0 %v448
      %v565 = vpop.f32.mrb[0].mxu0
      %v566 = vadd.f32 0.0, %v565
      %v567 = vpop.f32.mrb[0].mxu0
      %568 = vmatprep.mubr.f32.mxu0 0.0
      %569 = vmatmul.mubr.f32.gmra.mrb[0].mxu0 %v451
      %v570 = vpop.f32.mrb[0].mxu0
      %v571 = vadd.f32 0.0, %v570
      %v572 = vpop.f32.mrb[0].mxu0
      %573 = vmatprep.mubr.f32.mxu0 0.0
      %574 = vmatmul.mubr.f32.gmra.mrb[0].mxu0 %v454
      %v575 = vpop.f32.mrb[0].mxu0
      %v576 = vadd.f32 0.0, %v575
      %v577 = vpop.f32.mrb[0].mxu0
      %578 = vmatprep.mubr.f32.mxu0 0.0
      %579 = vmatmul.mubr.f32.gmra.mrb[0].mxu0 %v457
      %v580 = vpop.f32.mrb[0].mxu0
      %v581 = vadd.f32 0.0, %v580
      %v582 = vpop.f32.mrb[0].mxu0
      %583 = vdwg.mxu0
      %584 = vst [vmem:[#allocation2 + $0x18] sm:$0xff] %v526
      %585 = vst [vmem:[#allocation2 + $0x20] sm:$0xff] %v531
      %586 = vst [vmem:[#allocation2 + $0x28] sm:$0xff] %v536
      %587 = vst [vmem:[%s398 + $0x18] sm:$0xff] %v541
      %588 = vst [vmem:[%s398 + $0x20] sm:$0xff] %v546
      %589 = vst [vmem:[%s398 + $0x28] sm:$0xff] %v551
      %590 = vst [vmem:[%s402 + $0x18] sm:$0xff] %v556
      %591 = vst [vmem:[%s402 + $0x20] sm:$0xff] %v561
      %592 = vst [vmem:[%s402 + $0x28] sm:$0xff] %v566
      %593 = vst [vmem:[%s406 + $0x18] sm:$0xff] %v571
      %594 = vst [vmem:[%s406 + $0x20] sm:$0xff] %v576
      %595 = vst [vmem:[%s406 + $0x28] sm:$0xff] %v581
      %s596 = scalar_lea.vmem %s195, 192
      %v597 = vld [vmem:[%s596] sm:$0xff]
      %v598 = vld [vmem:[%s596 + $0x8] sm:$0xff]
      %v599 = vld [vmem:[%s596 + $0x10] sm:$0xff]
      %v600 = vld [vmem:[%s596 + $0x18] sm:$0xff]
      %v601 = vld [vmem:[%s596 + $0x20] sm:$0xff]
      %v602 = vld [vmem:[%s596 + $0x28] sm:$0xff]
      %v603 = vld [vmem:[%s596 + $0x30] sm:$0xff]
      %v604 = vld [vmem:[%s596 + $0x38] sm:$0xff]
      %v605 = vld [vmem:[%s596 + $0x40] sm:$0xff]
      %v606 = vld [vmem:[%s596 + $0x48] sm:$0xff]
      %v607 = vld [vmem:[%s596 + $0x50] sm:$0xff]
      %v608 = vld [vmem:[%s596 + $0x58] sm:$0xff]
      %v610 = vsel %vm233, %v597, 0
      %v613 = vsel %vm233, %v598, 0
      %v616 = vsel %vm233, %v599, 0
      %v619 = vsel %vm233, %v600, 0
      %v622 = vsel %vm233, %v601, 0
      %v625 = vsel %vm233, %v602, 0
      %v628 = vsel %vm233, %v603, 0
      %v631 = vsel %vm233, %v604, 0
      %v634 = vsel %vm233, %v605, 0
      %v637 = vsel %vm233, %v606, 0
      %v640 = vsel %vm233, %v607, 0
      %v643 = vsel %vm233, %v608, 0
      %645 = vmatprep.subr.mxu0 0.0
      %646 = vmatpush1.msra.mxu0 %v211
      %647 = vmatprep.subr.mxu0 0.0
      %648 = vmatpush1.msra.mxu0 %v212
      %649 = vmatprep.subr.mxu0 0.0
      %650 = vmatpush1.msra.mxu0 %v213
      %651 = vmatprep.subr.mxu0 0.0
      %652 = vmatpush1.msra.mxu0 %v214
      %653 = vmatprep.subr.mxu0 0.0
      %654 = vmatpush1.msra.mxu0 %v215
      %655 = vmatprep.subr.mxu0 0.0
      %656 = vmatpush1.msra.mxu0 %v216
      %657 = vmatprep.subr.mxu0 0.0
      %658 = vmatpush1.msra.mxu0 %v217
      %659 = vmatprep.subr.mxu0 0.0
      %660 = vmatpush1.msra.mxu0 %v218
      %661 = vmatprep.subr.mxu0 0.0
      %662 = vmatpush1.msra.mxu0 %v219
      %663 = vmatprep.subr.mxu0 0.0
      %664 = vmatpush1.msra.mxu0 %v220
      %665 = vmatprep.subr.mxu0 0.0
      %666 = vmatpush1.msra.mxu0 0.0
      %667 = vmatprep.subr.mxu0 0.0
      %668 = vmatpush1.msra.mxu0 0.0
      %669 = vmatprep.subr.mxu0 0.0
      %670 = vmatpush1.msra.mxu0 0.0
      %671 = vmatprep.subr.mxu0 0.0
      %672 = vmatpush1.msra.mxu0 0.0
      %673 = vmatprep.subr.mxu0 0.0
      %674 = vmatpush1.msra.mxu0 0.0
      %675 = vmatprep.subr.mxu0 0.0
      %676 = vmatpush1.msra.mxu0 0.0
      %677 = vmatprep.subr.mxu0 0.0
      %678 = vmatpush1.msra.mxu0 0.0
      %679 = vmatprep.subr.mxu0 0.0
      %680 = vmatpush1.msra.mxu0 0.0
      %681 = vmatprep.subr.mxu0 0.0
      %682 = vmatpush1.msra.mxu0 0.0
      %683 = vmatprep.subr.mxu0 0.0
      %684 = vmatpush1.msra.mxu0 0.0
      %685 = vmatprep.subr.mxu0 0.0
      %686 = vmatpush1.msra.mxu0 0.0
      %687 = vmatprep.subr.mxu0 0.0
      %688 = vmatpush1.msra.mxu0 0.0
      %689 = vmatprep.subr.mxu0 0.0
      %690 = vmatpush1.msra.mxu0 0.0
      %691 = vmatprep.subr.mxu0 0.0
      %692 = vmatpush1.msra.mxu0 0.0
      %693 = vmatprep.subr.mxu0 0.0
      %694 = vmatpush1.msra.mxu0 0.0
      %695 = vmatprep.subr.mxu0 0.0
      %696 = vmatpush1.msra.mxu0 0.0
      %697 = vmatprep.subr.mxu0 0.0
      %698 = vmatpush1.msra.mxu0 0.0
      %699 = vmatprep.subr.mxu0 0.0
      %700 = vmatpush1.msra.mxu0 0.0
      %701 = vmatprep.subr.mxu0 0.0
      %702 = vmatpush1.msra.mxu0 0.0
      %703 = vmatprep.subr.mxu0 0.0
      %704 = vmatpush1.msra.mxu0 0.0
      %705 = vmatprep.subr.mxu0 0.0
      %706 = vmatpush1.msra.mxu0 0.0
      %707 = vmatprep.subr.mxu0 0.0
      %708 = vmatpush1.msra.mxu0 0.0
      %709 = vmatprep.mubr.f32.mxu0 0.0
      %710 = vmatmul.mubr.f32.gmra.mrb[0].mxu0 %v610
      %v711 = vpop.f32.mrb[0].mxu0
      %v712 = vadd.f32 0.0, %v711
      %v713 = vpop.f32.mrb[0].mxu0
      %714 = vmatprep.mubr.f32.mxu0 0.0
      %715 = vmatmul.mubr.f32.gmra.mrb[0].mxu0 %v613
      %v716 = vpop.f32.mrb[0].mxu0
      %v717 = vadd.f32 0.0, %v716
      %v718 = vpop.f32.mrb[0].mxu0
      %719 = vmatprep.mubr.f32.mxu0 0.0
      %720 = vmatmul.mubr.f32.gmra.mrb[0].mxu0 %v616
      %v721 = vpop.f32.mrb[0].mxu0
      %v722 = vadd.f32 0.0, %v721
      %v723 = vpop.f32.mrb[0].mxu0
      %724 = vmatprep.mubr.f32.mxu0 0.0
      %725 = vmatmul.mubr.f32.gmra.mrb[0].mxu0 %v619
      %v726 = vpop.f32.mrb[0].mxu0
      %v727 = vadd.f32 0.0, %v726
      %v728 = vpop.f32.mrb[0].mxu0
      %729 = vmatprep.mubr.f32.mxu0 0.0
      %730 = vmatmul.mubr.f32.gmra.mrb[0].mxu0 %v622
      %v731 = vpop.f32.mrb[0].mxu0
      %v732 = vadd.f32 0.0, %v731
      %v733 = vpop.f32.mrb[0].mxu0
      %734 = vmatprep.mubr.f32.mxu0 0.0
      %735 = vmatmul.mubr.f32.gmra.mrb[0].mxu0 %v625
      %v736 = vpop.f32.mrb[0].mxu0
      %v737 = vadd.f32 0.0, %v736
      %v738 = vpop.f32.mrb[0].mxu0
      %739 = vmatprep.mubr.f32.mxu0 0.0
      %740 = vmatmul.mubr.f32.gmra.mrb[0].mxu0 %v628
      %v741 = vpop.f32.mrb[0].mxu0
      %v742 = vadd.f32 0.0, %v741
      %v743 = vpop.f32.mrb[0].mxu0
      %744 = vmatprep.mubr.f32.mxu0 0.0
      %745 = vmatmul.mubr.f32.gmra.mrb[0].mxu0 %v631
      %v746 = vpop.f32.mrb[0].mxu0
      %v747 = vadd.f32 0.0, %v746
      %v748 = vpop.f32.mrb[0].mxu0
      %749 = vmatprep.mubr.f32.mxu0 0.0
      %750 = vmatmul.mubr.f32.gmra.mrb[0].mxu0 %v634
      %v751 = vpop.f32.mrb[0].mxu0
      %v752 = vadd.f32 0.0, %v751
      %v753 = vpop.f32.mrb[0].mxu0
      %754 = vmatprep.mubr.f32.mxu0 0.0
      %755 = vmatmul.mubr.f32.gmra.mrb[0].mxu0 %v637
      %v756 = vpop.f32.mrb[0].mxu0
      %v757 = vadd.f32 0.0, %v756
      %v758 = vpop.f32.mrb[0].mxu0
      %759 = vmatprep.mubr.f32.mxu0 0.0
      %760 = vmatmul.mubr.f32.gmra.mrb[0].mxu0 %v640
      %v761 = vpop.f32.mrb[0].mxu0
      %v762 = vadd.f32 0.0, %v761
      %v763 = vpop.f32.mrb[0].mxu0
      %764 = vmatprep.mubr.f32.mxu0 0.0
      %765 = vmatmul.mubr.f32.gmra.mrb[0].mxu0 %v643
      %v766 = vpop.f32.mrb[0].mxu0
      %v767 = vadd.f32 0.0, %v766
      %v768 = vpop.f32.mrb[0].mxu0
      %769 = vdwg.mxu0
      %770 = vst [vmem:[#allocation2 + $0x30] sm:$0xff] %v712
      %771 = vst [vmem:[#allocation2 + $0x38] sm:$0xff] %v717
      %772 = vst [vmem:[#allocation2 + $0x40] sm:$0xff] %v722
      %773 = vst [vmem:[%s398 + $0x30] sm:$0xff] %v727
      %774 = vst [vmem:[%s398 + $0x38] sm:$0xff] %v732
      %775 = vst [vmem:[%s398 + $0x40] sm:$0xff] %v737
      %776 = vst [vmem:[%s402 + $0x30] sm:$0xff] %v742
      %777 = vst [vmem:[%s402 + $0x38] sm:$0xff] %v747
      %778 = vst [vmem:[%s402 + $0x40] sm:$0xff] %v752
      %779 = vst [vmem:[%s406 + $0x30] sm:$0xff] %v757
      %780 = vst [vmem:[%s406 + $0x38] sm:$0xff] %v762
      %781 = vst [vmem:[%s406 + $0x40] sm:$0xff] %v767
      %v782 = vld [vmem:[%s200] sm:$0xff]
      %v783 = vld [vmem:[%s200 + $0x8] sm:$0xff]
      %v784 = vld [vmem:[%s200 + $0x10] sm:$0xff]
      %v785 = vld [vmem:[#allocation2] sm:$0xff]
      %v786 = vld [vmem:[#allocation2 + $0x8] sm:$0xff]
      %v787 = vld [vmem:[#allocation2 + $0x10] sm:$0xff]
      %v788 = vld [vmem:[#allocation2 + $0x18] sm:$0xff]
      %v789 = vld [vmem:[#allocation2 + $0x20] sm:$0xff]
      %v790 = vld [vmem:[#allocation2 + $0x28] sm:$0xff]
      %v791 = vld [vmem:[#allocation2 + $0x30] sm:$0xff]
      %v792 = vld [vmem:[#allocation2 + $0x38] sm:$0xff]
      %v793 = vld [vmem:[#allocation2 + $0x40] sm:$0xff]
      %vm794 = vcmask 588800
      %v796 = vsel %vm794, %v782, 0
      %v799 = vsel %vm794, %v783, 0
      %v802 = vsel %vm794, %v784, 0
      %804 = vmatprep.subr.mxu0 0.0
      %805 = vmatpush1.msra.mxu0 %v785
      %806 = vmatprep.subr.mxu0 0.0
      %807 = vmatpush1.msra.mxu0 %v786
      %808 = vmatprep.subr.mxu0 0.0
      %809 = vmatpush1.msra.mxu0 %v787
      %810 = vmatprep.subr.mxu0 0.0
      %811 = vmatpush1.msra.mxu0 %v788
      %812 = vmatprep.subr.mxu0 0.0
      %813 = vmatpush1.msra.mxu0 %v789
      %814 = vmatprep.subr.mxu0 0.0
      %815 = vmatpush1.msra.mxu0 %v790
      %816 = vmatprep.subr.mxu0 0.0
      %817 = vmatpush1.msra.mxu0 %v791
      %818 = vmatprep.subr.mxu0 0.0
      %819 = vmatpush1.msra.mxu0 %v792
      %820 = vmatprep.subr.mxu0 0.0
      %821 = vmatpush1.msra.mxu0 %v793
      %822 = vmatprep.subr.mxu0 0.0
      %823 = vmatpush1.msra.mxu0 0.0
      %824 = vmatprep.subr.mxu0 0.0
      %825 = vmatpush1.msra.mxu0 0.0
      %826 = vmatprep.subr.mxu0 0.0
      %827 = vmatpush1.msra.mxu0 0.0
      %828 = vmatprep.subr.mxu0 0.0
      %829 = vmatpush1.msra.mxu0 0.0
      %830 = vmatprep.subr.mxu0 0.0
      %831 = vmatpush1.msra.mxu0 0.0
      %832 = vmatprep.subr.mxu0 0.0
      %833 = vmatpush1.msra.mxu0 0.0
      %834 = vmatprep.subr.mxu0 0.0
      %835 = vmatpush1.msra.mxu0 0.0
      %836 = vmatprep.subr.mxu0 0.0
      %837 = vmatpush1.msra.mxu0 0.0
      %838 = vmatprep.subr.mxu0 0.0
      %839 = vmatpush1.msra.mxu0 0.0
      %840 = vmatprep.subr.mxu0 0.0
      %841 = vmatpush1.msra.mxu0 0.0
      %842 = vmatprep.subr.mxu0 0.0
      %843 = vmatpush1.msra.mxu0 0.0
      %844 = vmatprep.subr.mxu0 0.0
      %845 = vmatpush1.msra.mxu0 0.0
      %846 = vmatprep.subr.mxu0 0.0
      %847 = vmatpush1.msra.mxu0 0.0
      %848 = vmatprep.subr.mxu0 0.0
      %849 = vmatpush1.msra.mxu0 0.0
      %850 = vmatprep.subr.mxu0 0.0
      %851 = vmatpush1.msra.mxu0 0.0
      %852 = vmatprep.subr.mxu0 0.0
      %853 = vmatpush1.msra.mxu0 0.0
      %854 = vmatprep.subr.mxu0 0.0
      %855 = vmatpush1.msra.mxu0 0.0
      %856 = vmatprep.subr.mxu0 0.0
      %857 = vmatpush1.msra.mxu0 0.0
      %858 = vmatprep.subr.mxu0 0.0
      %859 = vmatpush1.msra.mxu0 0.0
      %860 = vmatprep.subr.mxu0 0.0
      %861 = vmatpush1.msra.mxu0 0.0
      %862 = vmatprep.subr.mxu0 0.0
      %863 = vmatpush1.msra.mxu0 0.0
      %864 = vmatprep.subr.mxu0 0.0
      %865 = vmatpush1.msra.mxu0 0.0
      %866 = vmatprep.subr.mxu0 0.0
      %867 = vmatpush1.msra.mxu0 0.0
      %868 = vmatprep.mubr.f32.mxu0 0.0
      %869 = vmatmul.mubr.f32.gmra.mrb[0].mxu0 %v796
      %v870 = vpop.f32.mrb[0].mxu0
      %v871 = vadd.f32 0.0, %v870
      %v872 = vpop.f32.mrb[0].mxu0
      %873 = vmatprep.mubr.f32.mxu0 0.0
      %874 = vmatmul.mubr.f32.gmra.mrb[0].mxu0 %v799
      %v875 = vpop.f32.mrb[0].mxu0
      %v876 = vadd.f32 0.0, %v875
      %v877 = vpop.f32.mrb[0].mxu0
      %878 = vmatprep.mubr.f32.mxu0 0.0
      %879 = vmatmul.mubr.f32.gmra.mrb[0].mxu0 %v802
      %v880 = vpop.f32.mrb[0].mxu0
      %v881 = vadd.f32 0.0, %v880
      %v882 = vpop.f32.mrb[0].mxu0
      %883 = vdwg.mxu0
      %884 = vst [vmem:[%s210] sm:$0xff] %v871
      %885 = vst [vmem:[%s210 + $0x8] sm:$0xff] %v876
      %886 = vst [vmem:[%s210 + $0x10] sm:$0xff] %v881
      %v887 = vld [vmem:[%s398] sm:$0xff]
      %v888 = vld [vmem:[%s398 + $0x8] sm:$0xff]
      %v889 = vld [vmem:[%s398 + $0x10] sm:$0xff]
      %v890 = vld [vmem:[%s398 + $0x18] sm:$0xff]
      %v891 = vld [vmem:[%s398 + $0x20] sm:$0xff]
      %v892 = vld [vmem:[%s398 + $0x28] sm:$0xff]
      %v893 = vld [vmem:[%s398 + $0x30] sm:$0xff]
      %v894 = vld [vmem:[%s398 + $0x38] sm:$0xff]
      %v895 = vld [vmem:[%s398 + $0x40] sm:$0xff]
      %896 = vmatprep.subr.mxu0 0.0
      %897 = vmatpush1.msra.mxu0 %v887
      %898 = vmatprep.subr.mxu0 0.0
      %899 = vmatpush1.msra.mxu0 %v888
      %900 = vmatprep.subr.mxu0 0.0
      %901 = vmatpush1.msra.mxu0 %v889
      %902 = vmatprep.subr.mxu0 0.0
      %903 = vmatpush1.msra.mxu0 %v890
      %904 = vmatprep.subr.mxu0 0.0
      %905 = vmatpush1.msra.mxu0 %v891
      %906 = vmatprep.subr.mxu0 0.0
      %907 = vmatpush1.msra.mxu0 %v892
      %908 = vmatprep.subr.mxu0 0.0
      %909 = vmatpush1.msra.mxu0 %v893
      %910 = vmatprep.subr.mxu0 0.0
      %911 = vmatpush1.msra.mxu0 %v894
      %912 = vmatprep.subr.mxu0 0.0
      %913 = vmatpush1.msra.mxu0 %v895
      %914 = vmatprep.subr.mxu0 0.0
      %915 = vmatpush1.msra.mxu0 0.0
      %916 = vmatprep.subr.mxu0 0.0
      %917 = vmatpush1.msra.mxu0 0.0
      %918 = vmatprep.subr.mxu0 0.0
      %919 = vmatpush1.msra.mxu0 0.0
      %920 = vmatprep.subr.mxu0 0.0
      %921 = vmatpush1.msra.mxu0 0.0
      %922 = vmatprep.subr.mxu0 0.0
      %923 = vmatpush1.msra.mxu0 0.0
      %924 = vmatprep.subr.mxu0 0.0
      %925 = vmatpush1.msra.mxu0 0.0
      %926 = vmatprep.subr.mxu0 0.0
      %927 = vmatpush1.msra.mxu0 0.0
      %928 = vmatprep.subr.mxu0 0.0
      %929 = vmatpush1.msra.mxu0 0.0
      %930 = vmatprep.subr.mxu0 0.0
      %931 = vmatpush1.msra.mxu0 0.0
      %932 = vmatprep.subr.mxu0 0.0
      %933 = vmatpush1.msra.mxu0 0.0
      %934 = vmatprep.subr.mxu0 0.0
      %935 = vmatpush1.msra.mxu0 0.0
      %936 = vmatprep.subr.mxu0 0.0
      %937 = vmatpush1.msra.mxu0 0.0
      %938 = vmatprep.subr.mxu0 0.0
      %939 = vmatpush1.msra.mxu0 0.0
      %940 = vmatprep.subr.mxu0 0.0
      %941 = vmatpush1.msra.mxu0 0.0
      %942 = vmatprep.subr.mxu0 0.0
      %943 = vmatpush1.msra.mxu0 0.0
      %944 = vmatprep.subr.mxu0 0.0
      %945 = vmatpush1.msra.mxu0 0.0
      %946 = vmatprep.subr.mxu0 0.0
      %947 = vmatpush1.msra.mxu0 0.0
      %948 = vmatprep.subr.mxu0 0.0
      %949 = vmatpush1.msra.mxu0 0.0
      %950 = vmatprep.subr.mxu0 0.0
      %951 = vmatpush1.msra.mxu0 0.0
      %952 = vmatprep.subr.mxu0 0.0
      %953 = vmatpush1.msra.mxu0 0.0
      %954 = vmatprep.subr.mxu0 0.0
      %955 = vmatpush1.msra.mxu0 0.0
      %956 = vmatprep.subr.mxu0 0.0
      %957 = vmatpush1.msra.mxu0 0.0
      %958 = vmatprep.subr.mxu0 0.0
      %959 = vmatpush1.msra.mxu0 0.0
      %960 = vmatprep.mubr.f32.mxu0 0.0
      %961 = vmatmul.mubr.f32.gmra.mrb[0].mxu0 %v796
      %v962 = vpop.f32.mrb[0].mxu0
      %v963 = vadd.f32 0.0, %v962
      %v964 = vpop.f32.mrb[0].mxu0
      %965 = vmatprep.mubr.f32.mxu0 0.0
      %966 = vmatmul.mubr.f32.gmra.mrb[0].mxu0 %v799
      %v967 = vpop.f32.mrb[0].mxu0
      %v968 = vadd.f32 0.0, %v967
      %v969 = vpop.f32.mrb[0].mxu0
      %970 = vmatprep.mubr.f32.mxu0 0.0
      %971 = vmatmul.mubr.f32.gmra.mrb[0].mxu0 %v802
      %v972 = vpop.f32.mrb[0].mxu0
      %v973 = vadd.f32 0.0, %v972
      %v974 = vpop.f32.mrb[0].mxu0
      %975 = vdwg.mxu0
      %s976 = scalar_lea.vmem %s210, 24
      %977 = vst [vmem:[%s976] sm:$0xff] %v963
      %978 = vst [vmem:[%s976 + $0x8] sm:$0xff] %v968
      %979 = vst [vmem:[%s976 + $0x10] sm:$0xff] %v973
      %v980 = vld [vmem:[%s402] sm:$0xff]
      %v981 = vld [vmem:[%s402 + $0x8] sm:$0xff]
      %v982 = vld [vmem:[%s402 + $0x10] sm:$0xff]
      %v983 = vld [vmem:[%s402 + $0x18] sm:$0xff]
      %v984 = vld [vmem:[%s402 + $0x20] sm:$0xff]
      %v985 = vld [vmem:[%s402 + $0x28] sm:$0xff]
      %v986 = vld [vmem:[%s402 + $0x30] sm:$0xff]
      %v987 = vld [vmem:[%s402 + $0x38] sm:$0xff]
      %v988 = vld [vmem:[%s402 + $0x40] sm:$0xff]
      %989 = vmatprep.subr.mxu0 0.0
      %990 = vmatpush1.msra.mxu0 %v980
      %991 = vmatprep.subr.mxu0 0.0
      %992 = vmatpush1.msra.mxu0 %v981
      %993 = vmatprep.subr.mxu0 0.0
      %994 = vmatpush1.msra.mxu0 %v982
      %995 = vmatprep.subr.mxu0 0.0
      %996 = vmatpush1.msra.mxu0 %v983
      %997 = vmatprep.subr.mxu0 0.0
      %998 = vmatpush1.msra.mxu0 %v984
      %999 = vmatprep.subr.mxu0 0.0
      %1000 = vmatpush1.msra.mxu0 %v985
      %1001 = vmatprep.subr.mxu0 0.0
      %1002 = vmatpush1.msra.mxu0 %v986
      %1003 = vmatprep.subr.mxu0 0.0
      %1004 = vmatpush1.msra.mxu0 %v987
      %1005 = vmatprep.subr.mxu0 0.0
      %1006 = vmatpush1.msra.mxu0 %v988
      %1007 = vmatprep.subr.mxu0 0.0
      %1008 = vmatpush1.msra.mxu0 0.0
      %1009 = vmatprep.subr.mxu0 0.0
      %1010 = vmatpush1.msra.mxu0 0.0
      %1011 = vmatprep.subr.mxu0 0.0
      %1012 = vmatpush1.msra.mxu0 0.0
      %1013 = vmatprep.subr.mxu0 0.0
      %1014 = vmatpush1.msra.mxu0 0.0
      %1015 = vmatprep.subr.mxu0 0.0
      %1016 = vmatpush1.msra.mxu0 0.0
      %1017 = vmatprep.subr.mxu0 0.0
      %1018 = vmatpush1.msra.mxu0 0.0
      %1019 = vmatprep.subr.mxu0 0.0
      %1020 = vmatpush1.msra.mxu0 0.0
      %1021 = vmatprep.subr.mxu0 0.0
      %1022 = vmatpush1.msra.mxu0 0.0
      %1023 = vmatprep.subr.mxu0 0.0
      %1024 = vmatpush1.msra.mxu0 0.0
      %1025 = vmatprep.subr.mxu0 0.0
      %1026 = vmatpush1.msra.mxu0 0.0
      %1027 = vmatprep.subr.mxu0 0.0
      %1028 = vmatpush1.msra.mxu0 0.0
      %1029 = vmatprep.subr.mxu0 0.0
      %1030 = vmatpush1.msra.mxu0 0.0
      %1031 = vmatprep.subr.mxu0 0.0
      %1032 = vmatpush1.msra.mxu0 0.0
      %1033 = vmatprep.subr.mxu0 0.0
      %1034 = vmatpush1.msra.mxu0 0.0
      %1035 = vmatprep.subr.mxu0 0.0
      %1036 = vmatpush1.msra.mxu0 0.0
      %1037 = vmatprep.subr.mxu0 0.0
      %1038 = vmatpush1.msra.mxu0 0.0
      %1039 = vmatprep.subr.mxu0 0.0
      %1040 = vmatpush1.msra.mxu0 0.0
      %1041 = vmatprep.subr.mxu0 0.0
      %1042 = vmatpush1.msra.mxu0 0.0
      %1043 = vmatprep.subr.mxu0 0.0
      %1044 = vmatpush1.msra.mxu0 0.0
      %1045 = vmatprep.subr.mxu0 0.0
      %1046 = vmatpush1.msra.mxu0 0.0
      %1047 = vmatprep.subr.mxu0 0.0
      %1048 = vmatpush1.msra.mxu0 0.0
      %1049 = vmatprep.subr.mxu0 0.0
      %1050 = vmatpush1.msra.mxu0 0.0
      %1051 = vmatprep.subr.mxu0 0.0
      %1052 = vmatpush1.msra.mxu0 0.0
      %1053 = vmatprep.mubr.f32.mxu0 0.0
      %1054 = vmatmul.mubr.f32.gmra.mrb[0].mxu0 %v796
      %v1055 = vpop.f32.mrb[0].mxu0
      %v1056 = vadd.f32 0.0, %v1055
      %v1057 = vpop.f32.mrb[0].mxu0
      %1058 = vmatprep.mubr.f32.mxu0 0.0
      %1059 = vmatmul.mubr.f32.gmra.mrb[0].mxu0 %v799
      %v1060 = vpop.f32.mrb[0].mxu0
      %v1061 = vadd.f32 0.0, %v1060
      %v1062 = vpop.f32.mrb[0].mxu0
      %1063 = vmatprep.mubr.f32.mxu0 0.0
      %1064 = vmatmul.mubr.f32.gmra.mrb[0].mxu0 %v802
      %v1065 = vpop.f32.mrb[0].mxu0
      %v1066 = vadd.f32 0.0, %v1065
      %v1067 = vpop.f32.mrb[0].mxu0
      %1068 = vdwg.mxu0
      %s1069 = scalar_lea.vmem %s210, 48
      %1070 = vst [vmem:[%s1069] sm:$0xff] %v1056
      %1071 = vst [vmem:[%s1069 + $0x8] sm:$0xff] %v1061
      %1072 = vst [vmem:[%s1069 + $0x10] sm:$0xff] %v1066
      %v1073 = vld [vmem:[%s406] sm:$0xff]
      %v1074 = vld [vmem:[%s406 + $0x8] sm:$0xff]
      %v1075 = vld [vmem:[%s406 + $0x10] sm:$0xff]
      %v1076 = vld [vmem:[%s406 + $0x18] sm:$0xff]
      %v1077 = vld [vmem:[%s406 + $0x20] sm:$0xff]
      %v1078 = vld [vmem:[%s406 + $0x28] sm:$0xff]
      %v1079 = vld [vmem:[%s406 + $0x30] sm:$0xff]
      %v1080 = vld [vmem:[%s406 + $0x38] sm:$0xff]
      %v1081 = vld [vmem:[%s406 + $0x40] sm:$0xff]
      %1082 = vmatprep.subr.mxu0 0.0
      %1083 = vmatpush1.msra.mxu0 %v1073
      %1084 = vmatprep.subr.mxu0 0.0
      %1085 = vmatpush1.msra.mxu0 %v1074
      %1086 = vmatprep.subr.mxu0 0.0
      %1087 = vmatpush1.msra.mxu0 %v1075
      %1088 = vmatprep.subr.mxu0 0.0
      %1089 = vmatpush1.msra.mxu0 %v1076
      %1090 = vmatprep.subr.mxu0 0.0
      %1091 = vmatpush1.msra.mxu0 %v1077
      %1092 = vmatprep.subr.mxu0 0.0
      %1093 = vmatpush1.msra.mxu0 %v1078
      %1094 = vmatprep.subr.mxu0 0.0
      %1095 = vmatpush1.msra.mxu0 %v1079
      %1096 = vmatprep.subr.mxu0 0.0
      %1097 = vmatpush1.msra.mxu0 %v1080
      %1098 = vmatprep.subr.mxu0 0.0
      %1099 = vmatpush1.msra.mxu0 %v1081
      %1100 = vmatprep.subr.mxu0 0.0
      %1101 = vmatpush1.msra.mxu0 0.0
      %1102 = vmatprep.subr.mxu0 0.0
      %1103 = vmatpush1.msra.mxu0 0.0
      %1104 = vmatprep.subr.mxu0 0.0
      %1105 = vmatpush1.msra.mxu0 0.0
      %1106 = vmatprep.subr.mxu0 0.0
      %1107 = vmatpush1.msra.mxu0 0.0
      %1108 = vmatprep.subr.mxu0 0.0
      %1109 = vmatpush1.msra.mxu0 0.0
      %1110 = vmatprep.subr.mxu0 0.0
      %1111 = vmatpush1.msra.mxu0 0.0
      %1112 = vmatprep.subr.mxu0 0.0
      %1113 = vmatpush1.msra.mxu0 0.0
      %1114 = vmatprep.subr.mxu0 0.0
      %1115 = vmatpush1.msra.mxu0 0.0
      %1116 = vmatprep.subr.mxu0 0.0
      %1117 = vmatpush1.msra.mxu0 0.0
      %1118 = vmatprep.subr.mxu0 0.0
      %1119 = vmatpush1.msra.mxu0 0.0
      %1120 = vmatprep.subr.mxu0 0.0
      %1121 = vmatpush1.msra.mxu0 0.0
      %1122 = vmatprep.subr.mxu0 0.0
      %1123 = vmatpush1.msra.mxu0 0.0
      %1124 = vmatprep.subr.mxu0 0.0
      %1125 = vmatpush1.msra.mxu0 0.0
      %1126 = vmatprep.subr.mxu0 0.0
      %1127 = vmatpush1.msra.mxu0 0.0
      %1128 = vmatprep.subr.mxu0 0.0
      %1129 = vmatpush1.msra.mxu0 0.0
      %1130 = vmatprep.subr.mxu0 0.0
      %1131 = vmatpush1.msra.mxu0 0.0
      %1132 = vmatprep.subr.mxu0 0.0
      %1133 = vmatpush1.msra.mxu0 0.0
      %1134 = vmatprep.subr.mxu0 0.0
      %1135 = vmatpush1.msra.mxu0 0.0
      %1136 = vmatprep.subr.mxu0 0.0
      %1137 = vmatpush1.msra.mxu0 0.0
      %1138 = vmatprep.subr.mxu0 0.0
      %1139 = vmatpush1.msra.mxu0 0.0
      %1140 = vmatprep.subr.mxu0 0.0
      %1141 = vmatpush1.msra.mxu0 0.0
      %1142 = vmatprep.subr.mxu0 0.0
      %1143 = vmatpush1.msra.mxu0 0.0
      %1144 = vmatprep.subr.mxu0 0.0
      %1145 = vmatpush1.msra.mxu0 0.0
      %1146 = vmatprep.mubr.f32.mxu0 0.0
      %1147 = vmatmul.mubr.f32.gmra.mrb[0].mxu0 %v796
      %v1148 = vpop.f32.mrb[0].mxu0
      %v1149 = vadd.f32 0.0, %v1148
      %v1150 = vpop.f32.mrb[0].mxu0
      %1151 = vmatprep.mubr.f32.mxu0 0.0
      %1152 = vmatmul.mubr.f32.gmra.mrb[0].mxu0 %v799
      %v1153 = vpop.f32.mrb[0].mxu0
      %v1154 = vadd.f32 0.0, %v1153
      %v1155 = vpop.f32.mrb[0].mxu0
      %1156 = vmatprep.mubr.f32.mxu0 0.0
      %1157 = vmatmul.mubr.f32.gmra.mrb[0].mxu0 %v802
      %v1158 = vpop.f32.mrb[0].mxu0
      %v1159 = vadd.f32 0.0, %v1158
      %v1160 = vpop.f32.mrb[0].mxu0
      %1161 = vdwg.mxu0
      %s1162 = scalar_lea.vmem %s210, 72
      %1163 = vst [vmem:[%s1162] sm:$0xff] %v1149
      %1164 = vst [vmem:[%s1162 + $0x8] sm:$0xff] %v1154
      %1165 = vst [vmem:[%s1162 + $0x10] sm:$0xff] %v1159
      %p1166 = scmp.lt.s32.totalorder %s14, 2
      %s1167 = scalar_select %p1166, %s14, 2
      %s1168 = smul.addr %s1167, 12
      %s1169 = smul.addr %s1168, 8
      %s1170 = scalar_lea.vmem %s3, %s1169
      // Predicated region
      $region33: #{model_forward.1} parent=31 // pred_check
        %p1171 = pneg %p110
      $region34: #{model_forward.1} parent=31 // pred_check_branch
        %1173 = sbr.rel (%p1171) target = $region36
      $region35: #{model_forward.1} parent=31 // pred_region
        _
      $region36: #{model_forward.1} parent=31 // pred_fallthru
        _
    $region32: #{model_forward.1} parent=5 // pred_fallthru
      _
    %p1174 = scmp.le.s32.totalorder 2, %s9
    // Predicated region
    $region37: #{model_forward.1} parent=5 // pred_check
      %p1175 = pneg %p1174
    $region38: #{model_forward.1} parent=5 // pred_check_branch
      %1177 = sbr.rel (%p1175) target = $region40
    $region39: #{model_forward.1} parent=5 // pred_region
      %s1178 = ssub.s32 %s9, 2
      // Predicated region
      $region41: #{model_forward.1} parent=39 // pred_check
        %p1179 = pneg %p116
      $region42: #{model_forward.1} parent=39 // pred_check_branch
        %1181 = sbr.rel (%p1179) target = $region44
      $region43: #{model_forward.1} parent=39 // pred_region
        %p1182 = scmp.lt.s32.totalorder %s15, 2
        %s1183 = scalar_select %p1182, %s15, 2
        %s1184 = smul.addr %s1183, 12
        %s1185 = smul.addr %s1184, 8
        %s1186 = scalar_lea.vmem %s3, %s1185
      $region44: #{model_forward.1} parent=39 // pred_fallthru
        _
    $region40: #{model_forward.1} parent=5 // pred_fallthru
      _
  $region6: #{model_forward.1} parent=0 // loop_footer
    %s13 = sadd.s32 1, %s9
  $region7: #{model_forward.1} parent=0 // loop_footer_branch
    %8 = sbr.rel target = $region3
  $region8: #{model_forward.1} parent=0 // loop_exit
    _

</llo_original>
